<compile_context>
chip_gen: v5e
topology: v5e:2x2
jax: 0.10.0
libtpu: 0.0.40
codegen_flags: <defaults>
</compile_context>

<pallas_src>
import functools

import jax
import jax.numpy as jnp
import numpy as np
from jax.experimental import pallas as pl
from jax.experimental.pallas import tpu as pltpu

# ----------------------------- model dims -----------------------------------
NTOKEN = 64
NINP = 16
NUTT = 12
NAUX = 16
NHID = 32
NLAYERS = 2
SEQ = 8
BATCH = 4


# ------------------------------ Pallas kernel -------------------------------
def _l2rnn_kernel(
    emb_ref,    # (S*B, ninp)          f32
    aux_ref,    # (S*B, nutt)          f32
    wc_ref,     # (nutt, naux)         f32  (compressor weight, pre-transposed)
    bc_ref,     # (1, naux)            f32
    wih0a_ref,  # (naux, 4*nhid)       f32  (layer-0 input proj, aux rows)
    wih0e_ref,  # (ninp, 4*nhid)       f32  (layer-0 input proj, emb rows)
    whh0_ref,   # (nhid, 4*nhid)       f32
    b0_ref,     # (1, 4*nhid)          f32  (b_ih + b_hh, layer 0)
    wih1_ref,   # (nhid, 4*nhid)       f32
    whh1_ref,   # (nhid, 4*nhid)       f32
    b1_ref,     # (1, 4*nhid)          f32
    wd_ref,     # (nhid, ntoken)       f32  (decoder weight, pre-transposed)
    bd_ref,     # (1, ntoken)          f32
    h0_ref,     # (nlayers, B, nhid)   f32
    c0_ref,     # (nlayers, B, nhid)   f32
    # outputs
    dec_ref,    # (S*B, ntoken)        f32
    hn_ref,     # (nlayers, B, nhid)   f32
    cn_ref,     # (nlayers, B, nhid)   f32
    # scratch
    h1_all,     # (S*B, nhid)          f32  top-layer outputs for the decoder
    *,
    seq: int,
    batch: int,
    nhid: int,
):
    f32 = jnp.float32

    # ---- hoisted, non-recurrent compute: one MXU issue each for all S*B rows ----
    # compressor: ReLU(aux @ Wc^T + bc)
    aux_in = jnp.maximum(
        jnp.dot(aux_ref[...], wc_ref[...], preferred_element_type=f32) + bc_ref[...],
        0.0,
    )                                                       # (S*B, naux)

    # layer-0 input projection with the concat folded into two dots:
    #   cat([aux_in, emb], -1) @ Wih0^T == aux_in @ Wih0_t[:naux] + emb @ Wih0_t[naux:]
    gates0_in = (
        jnp.dot(aux_in, wih0a_ref[...], preferred_element_type=f32)
        + jnp.dot(emb_ref[...], wih0e_ref[...], preferred_element_type=f32)
        + b0_ref[...]
    )                                                       # (S*B, 4*nhid)

    whh0 = whh0_ref[...]
    wih1 = wih1_ref[...]
    whh1 = whh1_ref[...]
    b1 = b1_ref[...]

    def gate_split(g):
        # PyTorch gate order: i, f, g, o  (lane slices; sigmoid/tanh go to EUP)
        i = jax.nn.sigmoid(g[:, 0 * nhid:1 * nhid])
        f = jax.nn.sigmoid(g[:, 1 * nhid:2 * nhid])
        gg = jnp.tanh(g[:, 2 * nhid:3 * nhid])
        o = jax.nn.sigmoid(g[:, 3 * nhid:4 * nhid])
        return i, f, gg, o

    # carries live in vregs across the (fully unrolled) time loop
    h0 = h0_ref[0]
    c0 = c0_ref[0]
    h1 = h0_ref[1]
    c1 = c0_ref[1]

    # ---- fully unrolled recurrence: only h@Whh dots stay on the serial path ----
    for t in range(seq):
        lo, hi = t * batch, (t + 1) * batch

        # layer-1 recurrent dot issued first: depends only on previous-step h1,
        # so it can pipeline through the MXU alongside the layer-0 dot below.
        rec1 = jnp.dot(h1, whh1, preferred_element_type=f32)

        # layer 0 (input projection already hoisted; only recurrence here)
        g0 = gates0_in[lo:hi, :] + jnp.dot(h0, whh0, preferred_element_type=f32)
        i0, f0, gg0, o0 = gate_split(g0)
        c0 = f0 * c0 + i0 * gg0
        h0 = o0 * jnp.tanh(c0)

        # layer 1 (inter-layer dropout is identity at inference)
        g1 = jnp.dot(h0, wih1, preferred_element_type=f32) + rec1 + b1
        i1, f1, gg1, o1 = gate_split(g1)
        c1 = f1 * c1 + i1 * gg1
        h1 = o1 * jnp.tanh(c1)

        h1_all[lo:hi, :] = h1

    hn_ref[0] = h0
    hn_ref[1] = h1
    cn_ref[0] = c0
    cn_ref[1] = c1

    # ---- hoisted decoder: single (S*B, nhid) x (nhid, ntoken) matmul + dense store ----
    dec_ref[...] = (
        jnp.dot(h1_all[...], wd_ref[...], preferred_element_type=f32) + bd_ref[...]
    )


# ------------------------------- wrapper -------------------------------------
def l2rnn_forward(params, tokens, auxiliary, hidden):
    """Mirrors L2RNNModel.forward(input, auxiliary, hidden) with separate=0."""
    h0, c0 = hidden
    S, B = tokens.shape

    # glue: embedding lookup (gather) + parameter pre-transposes / flattening
    emb = jnp.take(params["emb"], tokens, axis=0).astype(jnp.float32)   # (S,B,ninp)
    emb_flat = emb.reshape(S * B, NINP)
    aux_flat = auxiliary.reshape(S * B, NUTT).astype(jnp.float32)

    wc_t = params["wc"].T                                   # (nutt, naux)
    bc = params["bc"].reshape(1, -1)
    wih0_t = params["wih0"].T                               # (naux+ninp, 4*nhid)
    wih0a = wih0_t[:NAUX]                                   # aux_in rows
    wih0e = wih0_t[NAUX:]                                   # emb rows
    whh0_t = params["whh0"].T
    b0 = (params["bih0"] + params["bhh0"]).reshape(1, -1)
    wih1_t = params["wih1"].T
    whh1_t = params["whh1"].T
    b1 = (params["bih1"] + params["bhh1"]).reshape(1, -1)
    wd_t = params["wd"].T                                   # (nhid, ntoken)
    bd = params["bd"].reshape(1, -1)

    vmem = pl.BlockSpec(memory_space=pltpu.MemorySpace.VMEM)
    out_shapes = (
        jax.ShapeDtypeStruct((S * B, NTOKEN), jnp.float32),
        jax.ShapeDtypeStruct((NLAYERS, B, NHID), jnp.float32),
        jax.ShapeDtypeStruct((NLAYERS, B, NHID), jnp.float32),
    )

    kernel = functools.partial(_l2rnn_kernel, seq=S, batch=B, nhid=NHID)

    dec_flat, h_n, c_n = pl.pallas_call(
        kernel,
        out_shape=out_shapes,
        in_specs=[vmem] * 15,
        out_specs=(vmem, vmem, vmem),
        scratch_shapes=[pltpu.VMEM((S * B, NHID), jnp.float32)],
    )(emb_flat, aux_flat, wc_t, bc, wih0a, wih0e, whh0_t, b0,
      wih1_t, whh1_t, b1, wd_t, bd, h0, c0)

    decoded = dec_flat.reshape(S, B, NTOKEN)
    penalty = jnp.zeros((1,), jnp.float32)   # natten == 0 path
    return decoded, (h_n, c_n), penalty


# --------------------------- pure-JAX reference -------------------------------
def l2rnn_reference(params, tokens, auxiliary, hidden):
    h0, c0 = hidden
    S, B = tokens.shape
    emb = jnp.take(params["emb"], tokens, axis=0).astype(jnp.float32)
    aux_in = jax.nn.relu(
        auxiliary.reshape(S * B, -1) @ params["wc"].T + params["bc"]
    ).reshape(S, B, -1)
    to_input = jnp.concatenate([aux_in, emb], axis=2)

    def cell(x, h, c, wih, whh, bih, bhh):
        gates = x @ wih.T + bih + h @ whh.T + bhh
        i = jax.nn.sigmoid(gates[:, 0 * NHID:1 * NHID])
        f = jax.nn.sigmoid(gates[:, 1 * NHID:2 * NHID])
        g = jnp.tanh(gates[:, 2 * NHID:3 * NHID])
        o = jax.nn.sigmoid(gates[:, 3 * NHID:4 * NHID])
        c_new = f * c + i * g
        return o * jnp.tanh(c_new), c_new

    def step(carry, x_t):
        h, c = carry
        h0_new, c0_new = cell(x_t, h[0], c[0], params["wih0"], params["whh0"],
                              params["bih0"], params["bhh0"])
        h1_new, c1_new = cell(h0_new, h[1], c[1], params["wih1"], params["whh1"],
                              params["bih1"], params["bhh1"])
        h_new = jnp.stack([h0_new, h1_new])
        c_new = jnp.stack([c0_new, c1_new])
        return (h_new, c_new), h1_new

    (h_n, c_n), outs = jax.lax.scan(step, (h0, c0), to_input)
    decoded = (outs.reshape(S * B, NHID) @ params["wd"].T + params["bd"]).reshape(
        S, B, NTOKEN
    )
    return decoded, (h_n, c_n), jnp.zeros((1,), jnp.float32)


# ------------------------------ param init -----------------------------------
def init_params(key):
    ks = jax.random.split(key, 16)
    u = lambda k, shape, r: jax.random.uniform(
        k, shape, jnp.float32, minval=-r, maxval=r
    )
    initrange = 0.1
    stdv = 1.0 / np.sqrt(NHID)
    return {
        "emb":  u(ks[0], (NTOKEN, NINP), initrange),
        "wc":   u(ks[1], (NAUX, NUTT), initrange),
        "bc":   jnp.zeros((NAUX,), jnp.float32),
        "wih0": u(ks[2], (4 * NHID, NINP + NAUX), stdv),
        "whh0": u(ks[3], (4 * NHID, NHID), stdv),
        "bih0": u(ks[4], (4 * NHID,), stdv),
        "bhh0": u(ks[5], (4 * NHID,), stdv),
        "wih1": u(ks[6], (4 * NHID, NHID), stdv),
        "whh1": u(ks[7], (4 * NHID, NHID), stdv),
        "bih1": u(ks[8], (4 * NHID,), stdv),
        "bhh1": u(ks[9], (4 * NHID,), stdv),
        "wd":   u(ks[10], (NTOKEN, NHID), initrange),
        "bd":   jnp.zeros((NTOKEN,), jnp.float32),
    }


# --------------------------------- main ---------------------------------------
if __name__ == "__main__":
    key = jax.random.PRNGKey(0)
    kp, kt, ka = jax.random.split(key, 3)

    params = init_params(kp)
    tokens = jax.random.randint(kt, (SEQ, BATCH), 0, NTOKEN, dtype=jnp.int32)
    auxiliary = jax.random.normal(ka, (SEQ, BATCH, NUTT), jnp.float32)
    # init_hidden(bsz) for LSTM
    h0 = jnp.zeros((NLAYERS, BATCH, NHID), jnp.float32)
    c0 = jnp.zeros((NLAYERS, BATCH, NHID), jnp.float32)

    decoded, (h_n, c_n), penalty = jax.block_until_ready(
        l2rnn_forward(params, tokens, auxiliary, (h0, c0))
    )

    # semantic check against a pure-JAX reference
    ref_dec, (ref_h, ref_c), _ = l2rnn_reference(params, tokens, auxiliary, (h0, c0))
    np.testing.assert_allclose(np.asarray(decoded), np.asarray(ref_dec),
                               rtol=1e-3, atol=1e-3)
    np.testing.assert_allclose(np.asarray(h_n), np.asarray(ref_h),
                               rtol=1e-3, atol=1e-3)
    np.testing.assert_allclose(np.asarray(c_n), np.asarray(ref_c),
                               rtol=1e-3, atol=1e-3)

    assert decoded.shape == (SEQ, BATCH, NTOKEN)
    assert h_n.shape == (NLAYERS, BATCH, NHID) and c_n.shape == (NLAYERS, BATCH, NHID)
    assert penalty.shape == (1,)
    print("KERNEL_OK")
</pallas_src>

<mosaic_0001>
module attributes {stable_mosaic.version = 11 : i64} {
  func.func @_l2rnn_kernel(%arg0: memref<32x16xf32, #tpu.memory_space<vmem>>, %arg1: memref<32x12xf32, #tpu.memory_space<vmem>>, %arg2: memref<12x16xf32, #tpu.memory_space<vmem>>, %arg3: memref<1x16xf32, #tpu.memory_space<vmem>>, %arg4: memref<16x128xf32, #tpu.memory_space<vmem>>, %arg5: memref<16x128xf32, #tpu.memory_space<vmem>>, %arg6: memref<32x128xf32, #tpu.memory_space<vmem>>, %arg7: memref<1x128xf32, #tpu.memory_space<vmem>>, %arg8: memref<32x128xf32, #tpu.memory_space<vmem>>, %arg9: memref<32x128xf32, #tpu.memory_space<vmem>>, %arg10: memref<1x128xf32, #tpu.memory_space<vmem>>, %arg11: memref<32x64xf32, #tpu.memory_space<vmem>>, %arg12: memref<1x64xf32, #tpu.memory_space<vmem>>, %arg13: memref<2x4x32xf32, #tpu.memory_space<vmem>>, %arg14: memref<2x4x32xf32, #tpu.memory_space<vmem>>, %arg15: memref<32x64xf32, #tpu.memory_space<vmem>>, %arg16: memref<2x4x32xf32, #tpu.memory_space<vmem>>, %arg17: memref<2x4x32xf32, #tpu.memory_space<vmem>>, %arg18: memref<32x32xf32, #tpu.memory_space<vmem>>) attributes {dimension_semantics = [], scalar_prefetch = 0 : i64, scratch_operands = 1 : i64, tpu.core_type = #tpu.core_type<tc>} {
    %c0 = arith.constant 0 : index
    %c0_0 = arith.constant 0 : index
    %0 = vector.load %arg1[%c0, %c0_0] : memref<32x12xf32, #tpu.memory_space<vmem>>, vector<32x12xf32>
    %c0_1 = arith.constant 0 : index
    %c0_2 = arith.constant 0 : index
    %1 = vector.load %arg2[%c0_1, %c0_2] : memref<12x16xf32, #tpu.memory_space<vmem>>, vector<12x16xf32>
    %cst = arith.constant dense<0.000000e+00> : vector<32x16xf32>
    %2 = tpu.matmul %0, %1, %cst {dimension_numbers = #tpu.dot_dimension_numbers<[1], [0], [0], [1], [0, 0, 1, 1], [], []>} : vector<32x12xf32>, vector<12x16xf32>, vector<32x16xf32> -> vector<32x16xf32>
    %c0_3 = arith.constant 0 : index
    %c0_4 = arith.constant 0 : index
    %3 = vector.load %arg3[%c0_3, %c0_4] : memref<1x16xf32, #tpu.memory_space<vmem>>, vector<1x16xf32>
    %4 = vector.broadcast %3 : vector<1x16xf32> to vector<32x16xf32>
    %5 = arith.addf %2, %4 : vector<32x16xf32>
    %cst_5 = arith.constant 0.000000e+00 : f32
    %6 = vector.broadcast %cst_5 : f32 to vector<32x16xf32>
    %7 = arith.maximumf %5, %6 : vector<32x16xf32>
    %c0_6 = arith.constant 0 : index
    %c0_7 = arith.constant 0 : index
    %8 = vector.load %arg4[%c0_6, %c0_7] : memref<16x128xf32, #tpu.memory_space<vmem>>, vector<16x128xf32>
    %cst_8 = arith.constant dense<0.000000e+00> : vector<32x128xf32>
    %9 = tpu.matmul %7, %8, %cst_8 {dimension_numbers = #tpu.dot_dimension_numbers<[1], [0], [0], [1], [0, 0, 1, 1], [], []>} : vector<32x16xf32>, vector<16x128xf32>, vector<32x128xf32> -> vector<32x128xf32>
    %c0_9 = arith.constant 0 : index
    %c0_10 = arith.constant 0 : index
    %10 = vector.load %arg0[%c0_9, %c0_10] : memref<32x16xf32, #tpu.memory_space<vmem>>, vector<32x16xf32>
    %c0_11 = arith.constant 0 : index
    %c0_12 = arith.constant 0 : index
    %11 = vector.load %arg5[%c0_11, %c0_12] : memref<16x128xf32, #tpu.memory_space<vmem>>, vector<16x128xf32>
    %cst_13 = arith.constant dense<0.000000e+00> : vector<32x128xf32>
    %12 = tpu.matmul %10, %11, %cst_13 {dimension_numbers = #tpu.dot_dimension_numbers<[1], [0], [0], [1], [0, 0, 1, 1], [], []>} : vector<32x16xf32>, vector<16x128xf32>, vector<32x128xf32> -> vector<32x128xf32>
    %13 = arith.addf %9, %12 : vector<32x128xf32>
    %c0_14 = arith.constant 0 : index
    %c0_15 = arith.constant 0 : index
    %14 = vector.load %arg7[%c0_14, %c0_15] : memref<1x128xf32, #tpu.memory_space<vmem>>, vector<1x128xf32>
    %15 = vector.broadcast %14 : vector<1x128xf32> to vector<32x128xf32>
    %16 = arith.addf %13, %15 : vector<32x128xf32>
    %c0_16 = arith.constant 0 : index
    %c0_17 = arith.constant 0 : index
    %17 = vector.load %arg6[%c0_16, %c0_17] : memref<32x128xf32, #tpu.memory_space<vmem>>, vector<32x128xf32>
    %c0_18 = arith.constant 0 : index
    %c0_19 = arith.constant 0 : index
    %18 = vector.load %arg8[%c0_18, %c0_19] : memref<32x128xf32, #tpu.memory_space<vmem>>, vector<32x128xf32>
    %c0_20 = arith.constant 0 : index
    %c0_21 = arith.constant 0 : index
    %19 = vector.load %arg9[%c0_20, %c0_21] : memref<32x128xf32, #tpu.memory_space<vmem>>, vector<32x128xf32>
    %c0_22 = arith.constant 0 : index
    %c0_23 = arith.constant 0 : index
    %20 = vector.load %arg10[%c0_22, %c0_23] : memref<1x128xf32, #tpu.memory_space<vmem>>, vector<1x128xf32>
    %c0_24 = arith.constant 0 : index
    %c0_25 = arith.constant 0 : index
    %c0_26 = arith.constant 0 : index
    %21 = vector.load %arg13[%c0_24, %c0_25, %c0_26] : memref<2x4x32xf32, #tpu.memory_space<vmem>>, vector<1x4x32xf32>
    %22 = vector.shape_cast %21 : vector<1x4x32xf32> to vector<4x32xf32>
    %c0_27 = arith.constant 0 : index
    %c0_28 = arith.constant 0 : index
    %c0_29 = arith.constant 0 : index
    %23 = vector.load %arg14[%c0_27, %c0_28, %c0_29] : memref<2x4x32xf32, #tpu.memory_space<vmem>>, vector<1x4x32xf32>
    %24 = vector.shape_cast %23 : vector<1x4x32xf32> to vector<4x32xf32>
    %c1 = arith.constant 1 : index
    %c0_30 = arith.constant 0 : index
    %c0_31 = arith.constant 0 : index
    %25 = vector.load %arg13[%c1, %c0_30, %c0_31] : memref<2x4x32xf32, #tpu.memory_space<vmem>>, vector<1x4x32xf32>
    %26 = vector.shape_cast %25 : vector<1x4x32xf32> to vector<4x32xf32>
    %c1_32 = arith.constant 1 : index
    %c0_33 = arith.constant 0 : index
    %c0_34 = arith.constant 0 : index
    %27 = vector.load %arg14[%c1_32, %c0_33, %c0_34] : memref<2x4x32xf32, #tpu.memory_space<vmem>>, vector<1x4x32xf32>
    %28 = vector.shape_cast %27 : vector<1x4x32xf32> to vector<4x32xf32>
    %cst_35 = arith.constant dense<0.000000e+00> : vector<4x128xf32>
    %29 = tpu.matmul %26, %19, %cst_35 {dimension_numbers = #tpu.dot_dimension_numbers<[1], [0], [0], [1], [0, 0, 1, 1], [], []>} : vector<4x32xf32>, vector<32x128xf32>, vector<4x128xf32> -> vector<4x128xf32>
    %30 = vector.extract_strided_slice %16 {offsets = [0, 0], sizes = [4, 128], strides = [1, 1]} : vector<32x128xf32> to vector<4x128xf32>
    %cst_36 = arith.constant dense<0.000000e+00> : vector<4x128xf32>
    %31 = tpu.matmul %22, %17, %cst_36 {dimension_numbers = #tpu.dot_dimension_numbers<[1], [0], [0], [1], [0, 0, 1, 1], [], []>} : vector<4x32xf32>, vector<32x128xf32>, vector<4x128xf32> -> vector<4x128xf32>
    %32 = arith.addf %30, %31 : vector<4x128xf32>
    %33 = vector.extract_strided_slice %32 {offsets = [0, 0], sizes = [4, 32], strides = [1, 1]} : vector<4x128xf32> to vector<4x32xf32>
    %34 = arith.negf %33 : vector<4x32xf32>
    %35 = math.exp %34 : vector<4x32xf32>
    %cst_37 = arith.constant 1.000000e+00 : f32
    %36 = vector.broadcast %cst_37 : f32 to vector<4x32xf32>
    %37 = arith.addf %36, %35 : vector<4x32xf32>
    %38 = arith.divf %36, %37 : vector<4x32xf32>
    %39 = vector.extract_strided_slice %32 {offsets = [0, 32], sizes = [4, 32], strides = [1, 1]} : vector<4x128xf32> to vector<4x32xf32>
    %40 = arith.negf %39 : vector<4x32xf32>
    %41 = math.exp %40 : vector<4x32xf32>
    %cst_38 = arith.constant 1.000000e+00 : f32
    %42 = vector.broadcast %cst_38 : f32 to vector<4x32xf32>
    %43 = arith.addf %42, %41 : vector<4x32xf32>
    %44 = arith.divf %42, %43 : vector<4x32xf32>
    %45 = vector.extract_strided_slice %32 {offsets = [0, 64], sizes = [4, 32], strides = [1, 1]} : vector<4x128xf32> to vector<4x32xf32>
    %46 = math.tanh %45 : vector<4x32xf32>
    %47 = vector.extract_strided_slice %32 {offsets = [0, 96], sizes = [4, 32], strides = [1, 1]} : vector<4x128xf32> to vector<4x32xf32>
    %48 = arith.negf %47 : vector<4x32xf32>
    %49 = math.exp %48 : vector<4x32xf32>
    %cst_39 = arith.constant 1.000000e+00 : f32
    %50 = vector.broadcast %cst_39 : f32 to vector<4x32xf32>
    %51 = arith.addf %50, %49 : vector<4x32xf32>
    %52 = arith.divf %50, %51 : vector<4x32xf32>
    %53 = arith.mulf %44, %24 : vector<4x32xf32>
    %54 = arith.mulf %38, %46 : vector<4x32xf32>
    %55 = arith.addf %53, %54 : vector<4x32xf32>
    %56 = math.tanh %55 : vector<4x32xf32>
    %57 = arith.mulf %52, %56 : vector<4x32xf32>
    %cst_40 = arith.constant dense<0.000000e+00> : vector<4x128xf32>
    %58 = tpu.matmul %57, %18, %cst_40 {dimension_numbers = #tpu.dot_dimension_numbers<[1], [0], [0], [1], [0, 0, 1, 1], [], []>} : vector<4x32xf32>, vector<32x128xf32>, vector<4x128xf32> -> vector<4x128xf32>
    %59 = arith.addf %58, %29 : vector<4x128xf32>
    %60 = vector.broadcast %20 : vector<1x128xf32> to vector<4x128xf32>
    %61 = arith.addf %59, %60 : vector<4x128xf32>
    %62 = vector.extract_strided_slice %61 {offsets = [0, 0], sizes = [4, 32], strides = [1, 1]} : vector<4x128xf32> to vector<4x32xf32>
    %63 = arith.negf %62 : vector<4x32xf32>
    %64 = math.exp %63 : vector<4x32xf32>
    %cst_41 = arith.constant 1.000000e+00 : f32
    %65 = vector.broadcast %cst_41 : f32 to vector<4x32xf32>
    %66 = arith.addf %65, %64 : vector<4x32xf32>
    %67 = arith.divf %65, %66 : vector<4x32xf32>
    %68 = vector.extract_strided_slice %61 {offsets = [0, 32], sizes = [4, 32], strides = [1, 1]} : vector<4x128xf32> to vector<4x32xf32>
    %69 = arith.negf %68 : vector<4x32xf32>
    %70 = math.exp %69 : vector<4x32xf32>
    %cst_42 = arith.constant 1.000000e+00 : f32
    %71 = vector.broadcast %cst_42 : f32 to vector<4x32xf32>
    %72 = arith.addf %71, %70 : vector<4x32xf32>
    %73 = arith.divf %71, %72 : vector<4x32xf32>
    %74 = vector.extract_strided_slice %61 {offsets = [0, 64], sizes = [4, 32], strides = [1, 1]} : vector<4x128xf32> to vector<4x32xf32>
    %75 = math.tanh %74 : vector<4x32xf32>
    %76 = vector.extract_strided_slice %61 {offsets = [0, 96], sizes = [4, 32], strides = [1, 1]} : vector<4x128xf32> to vector<4x32xf32>
    %77 = arith.negf %76 : vector<4x32xf32>
    %78 = math.exp %77 : vector<4x32xf32>
    %cst_43 = arith.constant 1.000000e+00 : f32
    %79 = vector.broadcast %cst_43 : f32 to vector<4x32xf32>
    %80 = arith.addf %79, %78 : vector<4x32xf32>
    %81 = arith.divf %79, %80 : vector<4x32xf32>
    %82 = arith.mulf %73, %28 : vector<4x32xf32>
    %83 = arith.mulf %67, %75 : vector<4x32xf32>
    %84 = arith.addf %82, %83 : vector<4x32xf32>
    %85 = math.tanh %84 : vector<4x32xf32>
    %86 = arith.mulf %81, %85 : vector<4x32xf32>
    %c0_44 = arith.constant 0 : index
    %c0_45 = arith.constant 0 : index
    %87 = vector.load %arg18[%c0_44, %c0_45] : memref<32x32xf32, #tpu.memory_space<vmem>>, vector<4x32xf32>
    tpu.vector_store %arg18[%c0_44, %c0_45], %86 {strides = array<i32>} : memref<32x32xf32, #tpu.memory_space<vmem>>, vector<4x32xf32>,
    %cst_46 = arith.constant dense<0.000000e+00> : vector<4x128xf32>
    %88 = tpu.matmul %86, %19, %cst_46 {dimension_numbers = #tpu.dot_dimension_numbers<[1], [0], [0], [1], [0, 0, 1, 1], [], []>} : vector<4x32xf32>, vector<32x128xf32>, vector<4x128xf32> -> vector<4x128xf32>
    %89 = vector.extract_strided_slice %16 {offsets = [4, 0], sizes = [4, 128], strides = [1, 1]} : vector<32x128xf32> to vector<4x128xf32>
    %cst_47 = arith.constant dense<0.000000e+00> : vector<4x128xf32>
    %90 = tpu.matmul %57, %17, %cst_47 {dimension_numbers = #tpu.dot_dimension_numbers<[1], [0], [0], [1], [0, 0, 1, 1], [], []>} : vector<4x32xf32>, vector<32x128xf32>, vector<4x128xf32> -> vector<4x128xf32>
    %91 = arith.addf %89, %90 : vector<4x128xf32>
    %92 = vector.extract_strided_slice %91 {offsets = [0, 0], sizes = [4, 32], strides = [1, 1]} : vector<4x128xf32> to vector<4x32xf32>
    %93 = arith.negf %92 : vector<4x32xf32>
    %94 = math.exp %93 : vector<4x32xf32>
    %cst_48 = arith.constant 1.000000e+00 : f32
    %95 = vector.broadcast %cst_48 : f32 to vector<4x32xf32>
    %96 = arith.addf %95, %94 : vector<4x32xf32>
    %97 = arith.divf %95, %96 : vector<4x32xf32>
    %98 = vector.extract_strided_slice %91 {offsets = [0, 32], sizes = [4, 32], strides = [1, 1]} : vector<4x128xf32> to vector<4x32xf32>
    %99 = arith.negf %98 : vector<4x32xf32>
    %100 = math.exp %99 : vector<4x32xf32>
    %cst_49 = arith.constant 1.000000e+00 : f32
    %101 = vector.broadcast %cst_49 : f32 to vector<4x32xf32>
    %102 = arith.addf %101, %100 : vector<4x32xf32>
    %103 = arith.divf %101, %102 : vector<4x32xf32>
    %104 = vector.extract_strided_slice %91 {offsets = [0, 64], sizes = [4, 32], strides = [1, 1]} : vector<4x128xf32> to vector<4x32xf32>
    %105 = math.tanh %104 : vector<4x32xf32>
    %106 = vector.extract_strided_slice %91 {offsets = [0, 96], sizes = [4, 32], strides = [1, 1]} : vector<4x128xf32> to vector<4x32xf32>
    %107 = arith.negf %106 : vector<4x32xf32>
    %108 = math.exp %107 : vector<4x32xf32>
    %cst_50 = arith.constant 1.000000e+00 : f32
    %109 = vector.broadcast %cst_50 : f32 to vector<4x32xf32>
    %110 = arith.addf %109, %108 : vector<4x32xf32>
    %111 = arith.divf %109, %110 : vector<4x32xf32>
    %112 = arith.mulf %103, %55 : vector<4x32xf32>
    %113 = arith.mulf %97, %105 : vector<4x32xf32>
    %114 = arith.addf %112, %113 : vector<4x32xf32>
    %115 = math.tanh %114 : vector<4x32xf32>
    %116 = arith.mulf %111, %115 : vector<4x32xf32>
    %cst_51 = arith.constant dense<0.000000e+00> : vector<4x128xf32>
    %117 = tpu.matmul %116, %18, %cst_51 {dimension_numbers = #tpu.dot_dimension_numbers<[1], [0], [0], [1], [0, 0, 1, 1], [], []>} : vector<4x32xf32>, vector<32x128xf32>, vector<4x128xf32> -> vector<4x128xf32>
    %118 = arith.addf %117, %88 : vector<4x128xf32>
    %119 = vector.broadcast %20 : vector<1x128xf32> to vector<4x128xf32>
    %120 = arith.addf %118, %119 : vector<4x128xf32>
    %121 = vector.extract_strided_slice %120 {offsets = [0, 0], sizes = [4, 32], strides = [1, 1]} : vector<4x128xf32> to vector<4x32xf32>
    %122 = arith.negf %121 : vector<4x32xf32>
    %123 = math.exp %122 : vector<4x32xf32>
    %cst_52 = arith.constant 1.000000e+00 : f32
    %124 = vector.broadcast %cst_52 : f32 to vector<4x32xf32>
    %125 = arith.addf %124, %123 : vector<4x32xf32>
    %126 = arith.divf %124, %125 : vector<4x32xf32>
    %127 = vector.extract_strided_slice %120 {offsets = [0, 32], sizes = [4, 32], strides = [1, 1]} : vector<4x128xf32> to vector<4x32xf32>
    %128 = arith.negf %127 : vector<4x32xf32>
    %129 = math.exp %128 : vector<4x32xf32>
    %cst_53 = arith.constant 1.000000e+00 : f32
    %130 = vector.broadcast %cst_53 : f32 to vector<4x32xf32>
    %131 = arith.addf %130, %129 : vector<4x32xf32>
    %132 = arith.divf %130, %131 : vector<4x32xf32>
    %133 = vector.extract_strided_slice %120 {offsets = [0, 64], sizes = [4, 32], strides = [1, 1]} : vector<4x128xf32> to vector<4x32xf32>
    %134 = math.tanh %133 : vector<4x32xf32>
    %135 = vector.extract_strided_slice %120 {offsets = [0, 96], sizes = [4, 32], strides = [1, 1]} : vector<4x128xf32> to vector<4x32xf32>
    %136 = arith.negf %135 : vector<4x32xf32>
    %137 = math.exp %136 : vector<4x32xf32>
    %cst_54 = arith.constant 1.000000e+00 : f32
    %138 = vector.broadcast %cst_54 : f32 to vector<4x32xf32>
    %139 = arith.addf %138, %137 : vector<4x32xf32>
    %140 = arith.divf %138, %139 : vector<4x32xf32>
    %141 = arith.mulf %132, %84 : vector<4x32xf32>
    %142 = arith.mulf %126, %134 : vector<4x32xf32>
    %143 = arith.addf %141, %142 : vector<4x32xf32>
    %144 = math.tanh %143 : vector<4x32xf32>
    %145 = arith.mulf %140, %144 : vector<4x32xf32>
    %c4 = arith.constant 4 : index
    %c0_55 = arith.constant 0 : index
    %146 = vector.load %arg18[%c4, %c0_55] : memref<32x32xf32, #tpu.memory_space<vmem>>, vector<4x32xf32>
    tpu.vector_store %arg18[%c4, %c0_55], %145 {strides = array<i32>} : memref<32x32xf32, #tpu.memory_space<vmem>>, vector<4x32xf32>,
    %cst_56 = arith.constant dense<0.000000e+00> : vector<4x128xf32>
    %147 = tpu.matmul %145, %19, %cst_56 {dimension_numbers = #tpu.dot_dimension_numbers<[1], [0], [0], [1], [0, 0, 1, 1], [], []>} : vector<4x32xf32>, vector<32x128xf32>, vector<4x128xf32> -> vector<4x128xf32>
    %148 = vector.extract_strided_slice %16 {offsets = [8, 0], sizes = [4, 128], strides = [1, 1]} : vector<32x128xf32> to vector<4x128xf32>
    %cst_57 = arith.constant dense<0.000000e+00> : vector<4x128xf32>
    %149 = tpu.matmul %116, %17, %cst_57 {dimension_numbers = #tpu.dot_dimension_numbers<[1], [0], [0], [1], [0, 0, 1, 1], [], []>} : vector<4x32xf32>, vector<32x128xf32>, vector<4x128xf32> -> vector<4x128xf32>
    %150 = arith.addf %148, %149 : vector<4x128xf32>
    %151 = vector.extract_strided_slice %150 {offsets = [0, 0], sizes = [4, 32], strides = [1, 1]} : vector<4x128xf32> to vector<4x32xf32>
    %152 = arith.negf %151 : vector<4x32xf32>
    %153 = math.exp %152 : vector<4x32xf32>
    %cst_58 = arith.constant 1.000000e+00 : f32
    %154 = vector.broadcast %cst_58 : f32 to vector<4x32xf32>
    %155 = arith.addf %154, %153 : vector<4x32xf32>
    %156 = arith.divf %154, %155 : vector<4x32xf32>
    %157 = vector.extract_strided_slice %150 {offsets = [0, 32], sizes = [4, 32], strides = [1, 1]} : vector<4x128xf32> to vector<4x32xf32>
    %158 = arith.negf %157 : vector<4x32xf32>
    %159 = math.exp %158 : vector<4x32xf32>
    %cst_59 = arith.constant 1.000000e+00 : f32
    %160 = vector.broadcast %cst_59 : f32 to vector<4x32xf32>
    %161 = arith.addf %160, %159 : vector<4x32xf32>
    %162 = arith.divf %160, %161 : vector<4x32xf32>
    %163 = vector.extract_strided_slice %150 {offsets = [0, 64], sizes = [4, 32], strides = [1, 1]} : vector<4x128xf32> to vector<4x32xf32>
    %164 = math.tanh %163 : vector<4x32xf32>
    %165 = vector.extract_strided_slice %150 {offsets = [0, 96], sizes = [4, 32], strides = [1, 1]} : vector<4x128xf32> to vector<4x32xf32>
    %166 = arith.negf %165 : vector<4x32xf32>
    %167 = math.exp %166 : vector<4x32xf32>
    %cst_60 = arith.constant 1.000000e+00 : f32
    %168 = vector.broadcast %cst_60 : f32 to vector<4x32xf32>
    %169 = arith.addf %168, %167 : vector<4x32xf32>
    %170 = arith.divf %168, %169 : vector<4x32xf32>
    %171 = arith.mulf %162, %114 : vector<4x32xf32>
    %172 = arith.mulf %156, %164 : vector<4x32xf32>
    %173 = arith.addf %171, %172 : vector<4x32xf32>
    %174 = math.tanh %173 : vector<4x32xf32>
    %175 = arith.mulf %170, %174 : vector<4x32xf32>
    %cst_61 = arith.constant dense<0.000000e+00> : vector<4x128xf32>
    %176 = tpu.matmul %175, %18, %cst_61 {dimension_numbers = #tpu.dot_dimension_numbers<[1], [0], [0], [1], [0, 0, 1, 1], [], []>} : vector<4x32xf32>, vector<32x128xf32>, vector<4x128xf32> -> vector<4x128xf32>
    %177 = arith.addf %176, %147 : vector<4x128xf32>
    %178 = vector.broadcast %20 : vector<1x128xf32> to vector<4x128xf32>
    %179 = arith.addf %177, %178 : vector<4x128xf32>
    %180 = vector.extract_strided_slice %179 {offsets = [0, 0], sizes = [4, 32], strides = [1, 1]} : vector<4x128xf32> to vector<4x32xf32>
    %181 = arith.negf %180 : vector<4x32xf32>
    %182 = math.exp %181 : vector<4x32xf32>
    %cst_62 = arith.constant 1.000000e+00 : f32
    %183 = vector.broadcast %cst_62 : f32 to vector<4x32xf32>
    %184 = arith.addf %183, %182 : vector<4x32xf32>
    %185 = arith.divf %183, %184 : vector<4x32xf32>
    %186 = vector.extract_strided_slice %179 {offsets = [0, 32], sizes = [4, 32], strides = [1, 1]} : vector<4x128xf32> to vector<4x32xf32>
    %187 = arith.negf %186 : vector<4x32xf32>
    %188 = math.exp %187 : vector<4x32xf32>
    %cst_63 = arith.constant 1.000000e+00 : f32
    %189 = vector.broadcast %cst_63 : f32 to vector<4x32xf32>
    %190 = arith.addf %189, %188 : vector<4x32xf32>
    %191 = arith.divf %189, %190 : vector<4x32xf32>
    %192 = vector.extract_strided_slice %179 {offsets = [0, 64], sizes = [4, 32], strides = [1, 1]} : vector<4x128xf32> to vector<4x32xf32>
    %193 = math.tanh %192 : vector<4x32xf32>
    %194 = vector.extract_strided_slice %179 {offsets = [0, 96], sizes = [4, 32], strides = [1, 1]} : vector<4x128xf32> to vector<4x32xf32>
    %195 = arith.negf %194 : vector<4x32xf32>
    %196 = math.exp %195 : vector<4x32xf32>
    %cst_64 = arith.constant 1.000000e+00 : f32
    %197 = vector.broadcast %cst_64 : f32 to vector<4x32xf32>
    %198 = arith.addf %197, %196 : vector<4x32xf32>
    %199 = arith.divf %197, %198 : vector<4x32xf32>
    %200 = arith.mulf %191, %143 : vector<4x32xf32>
    %201 = arith.mulf %185, %193 : vector<4x32xf32>
    %202 = arith.addf %200, %201 : vector<4x32xf32>
    %203 = math.tanh %202 : vector<4x32xf32>
    %204 = arith.mulf %199, %203 : vector<4x32xf32>
    %c8 = arith.constant 8 : index
    %c0_65 = arith.constant 0 : index
    %205 = vector.load %arg18[%c8, %c0_65] : memref<32x32xf32, #tpu.memory_space<vmem>>, vector<4x32xf32>
    tpu.vector_store %arg18[%c8, %c0_65], %204 {strides = array<i32>} : memref<32x32xf32, #tpu.memory_space<vmem>>, vector<4x32xf32>,
    %cst_66 = arith.constant dense<0.000000e+00> : vector<4x128xf32>
    %206 = tpu.matmul %204, %19, %cst_66 {dimension_numbers = #tpu.dot_dimension_numbers<[1], [0], [0], [1], [0, 0, 1, 1], [], []>} : vector<4x32xf32>, vector<32x128xf32>, vector<4x128xf32> -> vector<4x128xf32>
    %207 = vector.extract_strided_slice %16 {offsets = [12, 0], sizes = [4, 128], strides = [1, 1]} : vector<32x128xf32> to vector<4x128xf32>
    %cst_67 = arith.constant dense<0.000000e+00> : vector<4x128xf32>
    %208 = tpu.matmul %175, %17, %cst_67 {dimension_numbers = #tpu.dot_dimension_numbers<[1], [0], [0], [1], [0, 0, 1, 1], [], []>} : vector<4x32xf32>, vector<32x128xf32>, vector<4x128xf32> -> vector<4x128xf32>
    %209 = arith.addf %207, %208 : vector<4x128xf32>
    %210 = vector.extract_strided_slice %209 {offsets = [0, 0], sizes = [4, 32], strides = [1, 1]} : vector<4x128xf32> to vector<4x32xf32>
    %211 = arith.negf %210 : vector<4x32xf32>
    %212 = math.exp %211 : vector<4x32xf32>
    %cst_68 = arith.constant 1.000000e+00 : f32
    %213 = vector.broadcast %cst_68 : f32 to vector<4x32xf32>
    %214 = arith.addf %213, %212 : vector<4x32xf32>
    %215 = arith.divf %213, %214 : vector<4x32xf32>
    %216 = vector.extract_strided_slice %209 {offsets = [0, 32], sizes = [4, 32], strides = [1, 1]} : vector<4x128xf32> to vector<4x32xf32>
    %217 = arith.negf %216 : vector<4x32xf32>
    %218 = math.exp %217 : vector<4x32xf32>
    %cst_69 = arith.constant 1.000000e+00 : f32
    %219 = vector.broadcast %cst_69 : f32 to vector<4x32xf32>
    %220 = arith.addf %219, %218 : vector<4x32xf32>
    %221 = arith.divf %219, %220 : vector<4x32xf32>
    %222 = vector.extract_strided_slice %209 {offsets = [0, 64], sizes = [4, 32], strides = [1, 1]} : vector<4x128xf32> to vector<4x32xf32>
    %223 = math.tanh %222 : vector<4x32xf32>
    %224 = vector.extract_strided_slice %209 {offsets = [0, 96], sizes = [4, 32], strides = [1, 1]} : vector<4x128xf32> to vector<4x32xf32>
    %225 = arith.negf %224 : vector<4x32xf32>
    %226 = math.exp %225 : vector<4x32xf32>
    %cst_70 = arith.constant 1.000000e+00 : f32
    %227 = vector.broadcast %cst_70 : f32 to vector<4x32xf32>
    %228 = arith.addf %227, %226 : vector<4x32xf32>
    %229 = arith.divf %227, %228 : vector<4x32xf32>
    %230 = arith.mulf %221, %173 : vector<4x32xf32>
    %231 = arith.mulf %215, %223 : vector<4x32xf32>
    %232 = arith.addf %230, %231 : vector<4x32xf32>
    %233 = math.tanh %232 : vector<4x32xf32>
    %234 = arith.mulf %229, %233 : vector<4x32xf32>
    %cst_71 = arith.constant dense<0.000000e+00> : vector<4x128xf32>
    %235 = tpu.matmul %234, %18, %cst_71 {dimension_numbers = #tpu.dot_dimension_numbers<[1], [0], [0], [1], [0, 0, 1, 1], [], []>} : vector<4x32xf32>, vector<32x128xf32>, vector<4x128xf32> -> vector<4x128xf32>
    %236 = arith.addf %235, %206 : vector<4x128xf32>
    %237 = vector.broadcast %20 : vector<1x128xf32> to vector<4x128xf32>
    %238 = arith.addf %236, %237 : vector<4x128xf32>
    %239 = vector.extract_strided_slice %238 {offsets = [0, 0], sizes = [4, 32], strides = [1, 1]} : vector<4x128xf32> to vector<4x32xf32>
    %240 = arith.negf %239 : vector<4x32xf32>
    %241 = math.exp %240 : vector<4x32xf32>
    %cst_72 = arith.constant 1.000000e+00 : f32
    %242 = vector.broadcast %cst_72 : f32 to vector<4x32xf32>
    %243 = arith.addf %242, %241 : vector<4x32xf32>
    %244 = arith.divf %242, %243 : vector<4x32xf32>
    %245 = vector.extract_strided_slice %238 {offsets = [0, 32], sizes = [4, 32], strides = [1, 1]} : vector<4x128xf32> to vector<4x32xf32>
    %246 = arith.negf %245 : vector<4x32xf32>
    %247 = math.exp %246 : vector<4x32xf32>
    %cst_73 = arith.constant 1.000000e+00 : f32
    %248 = vector.broadcast %cst_73 : f32 to vector<4x32xf32>
    %249 = arith.addf %248, %247 : vector<4x32xf32>
    %250 = arith.divf %248, %249 : vector<4x32xf32>
    %251 = vector.extract_strided_slice %238 {offsets = [0, 64], sizes = [4, 32], strides = [1, 1]} : vector<4x128xf32> to vector<4x32xf32>
    %252 = math.tanh %251 : vector<4x32xf32>
    %253 = vector.extract_strided_slice %238 {offsets = [0, 96], sizes = [4, 32], strides = [1, 1]} : vector<4x128xf32> to vector<4x32xf32>
    %254 = arith.negf %253 : vector<4x32xf32>
    %255 = math.exp %254 : vector<4x32xf32>
    %cst_74 = arith.constant 1.000000e+00 : f32
    %256 = vector.broadcast %cst_74 : f32 to vector<4x32xf32>
    %257 = arith.addf %256, %255 : vector<4x32xf32>
    %258 = arith.divf %256, %257 : vector<4x32xf32>
    %259 = arith.mulf %250, %202 : vector<4x32xf32>
    %260 = arith.mulf %244, %252 : vector<4x32xf32>
    %261 = arith.addf %259, %260 : vector<4x32xf32>
    %262 = math.tanh %261 : vector<4x32xf32>
    %263 = arith.mulf %258, %262 : vector<4x32xf32>
    %c12 = arith.constant 12 : index
    %c0_75 = arith.constant 0 : index
    %264 = vector.load %arg18[%c12, %c0_75] : memref<32x32xf32, #tpu.memory_space<vmem>>, vector<4x32xf32>
    tpu.vector_store %arg18[%c12, %c0_75], %263 {strides = array<i32>} : memref<32x32xf32, #tpu.memory_space<vmem>>, vector<4x32xf32>,
    %cst_76 = arith.constant dense<0.000000e+00> : vector<4x128xf32>
    %265 = tpu.matmul %263, %19, %cst_76 {dimension_numbers = #tpu.dot_dimension_numbers<[1], [0], [0], [1], [0, 0, 1, 1], [], []>} : vector<4x32xf32>, vector<32x128xf32>, vector<4x128xf32> -> vector<4x128xf32>
    %266 = vector.extract_strided_slice %16 {offsets = [16, 0], sizes = [4, 128], strides = [1, 1]} : vector<32x128xf32> to vector<4x128xf32>
    %cst_77 = arith.constant dense<0.000000e+00> : vector<4x128xf32>
    %267 = tpu.matmul %234, %17, %cst_77 {dimension_numbers = #tpu.dot_dimension_numbers<[1], [0], [0], [1], [0, 0, 1, 1], [], []>} : vector<4x32xf32>, vector<32x128xf32>, vector<4x128xf32> -> vector<4x128xf32>
    %268 = arith.addf %266, %267 : vector<4x128xf32>
    %269 = vector.extract_strided_slice %268 {offsets = [0, 0], sizes = [4, 32], strides = [1, 1]} : vector<4x128xf32> to vector<4x32xf32>
    %270 = arith.negf %269 : vector<4x32xf32>
    %271 = math.exp %270 : vector<4x32xf32>
    %cst_78 = arith.constant 1.000000e+00 : f32
    %272 = vector.broadcast %cst_78 : f32 to vector<4x32xf32>
    %273 = arith.addf %272, %271 : vector<4x32xf32>
    %274 = arith.divf %272, %273 : vector<4x32xf32>
    %275 = vector.extract_strided_slice %268 {offsets = [0, 32], sizes = [4, 32], strides = [1, 1]} : vector<4x128xf32> to vector<4x32xf32>
    %276 = arith.negf %275 : vector<4x32xf32>
    %277 = math.exp %276 : vector<4x32xf32>
    %cst_79 = arith.constant 1.000000e+00 : f32
    %278 = vector.broadcast %cst_79 : f32 to vector<4x32xf32>
    %279 = arith.addf %278, %277 : vector<4x32xf32>
    %280 = arith.divf %278, %279 : vector<4x32xf32>
    %281 = vector.extract_strided_slice %268 {offsets = [0, 64], sizes = [4, 32], strides = [1, 1]} : vector<4x128xf32> to vector<4x32xf32>
    %282 = math.tanh %281 : vector<4x32xf32>
    %283 = vector.extract_strided_slice %268 {offsets = [0, 96], sizes = [4, 32], strides = [1, 1]} : vector<4x128xf32> to vector<4x32xf32>
    %284 = arith.negf %283 : vector<4x32xf32>
    %285 = math.exp %284 : vector<4x32xf32>
    %cst_80 = arith.constant 1.000000e+00 : f32
    %286 = vector.broadcast %cst_80 : f32 to vector<4x32xf32>
    %287 = arith.addf %286, %285 : vector<4x32xf32>
    %288 = arith.divf %286, %287 : vector<4x32xf32>
    %289 = arith.mulf %280, %232 : vector<4x32xf32>
    %290 = arith.mulf %274, %282 : vector<4x32xf32>
    %291 = arith.addf %289, %290 : vector<4x32xf32>
    %292 = math.tanh %291 : vector<4x32xf32>
    %293 = arith.mulf %288, %292 : vector<4x32xf32>
    %cst_81 = arith.constant dense<0.000000e+00> : vector<4x128xf32>
    %294 = tpu.matmul %293, %18, %cst_81 {dimension_numbers = #tpu.dot_dimension_numbers<[1], [0], [0], [1], [0, 0, 1, 1], [], []>} : vector<4x32xf32>, vector<32x128xf32>, vector<4x128xf32> -> vector<4x128xf32>
    %295 = arith.addf %294, %265 : vector<4x128xf32>
    %296 = vector.broadcast %20 : vector<1x128xf32> to vector<4x128xf32>
    %297 = arith.addf %295, %296 : vector<4x128xf32>
    %298 = vector.extract_strided_slice %297 {offsets = [0, 0], sizes = [4, 32], strides = [1, 1]} : vector<4x128xf32> to vector<4x32xf32>
    %299 = arith.negf %298 : vector<4x32xf32>
    %300 = math.exp %299 : vector<4x32xf32>
    %cst_82 = arith.constant 1.000000e+00 : f32
    %301 = vector.broadcast %cst_82 : f32 to vector<4x32xf32>
    %302 = arith.addf %301, %300 : vector<4x32xf32>
    %303 = arith.divf %301, %302 : vector<4x32xf32>
    %304 = vector.extract_strided_slice %297 {offsets = [0, 32], sizes = [4, 32], strides = [1, 1]} : vector<4x128xf32> to vector<4x32xf32>
    %305 = arith.negf %304 : vector<4x32xf32>
    %306 = math.exp %305 : vector<4x32xf32>
    %cst_83 = arith.constant 1.000000e+00 : f32
    %307 = vector.broadcast %cst_83 : f32 to vector<4x32xf32>
    %308 = arith.addf %307, %306 : vector<4x32xf32>
    %309 = arith.divf %307, %308 : vector<4x32xf32>
    %310 = vector.extract_strided_slice %297 {offsets = [0, 64], sizes = [4, 32], strides = [1, 1]} : vector<4x128xf32> to vector<4x32xf32>
    %311 = math.tanh %310 : vector<4x32xf32>
    %312 = vector.extract_strided_slice %297 {offsets = [0, 96], sizes = [4, 32], strides = [1, 1]} : vector<4x128xf32> to vector<4x32xf32>
    %313 = arith.negf %312 : vector<4x32xf32>
    %314 = math.exp %313 : vector<4x32xf32>
    %cst_84 = arith.constant 1.000000e+00 : f32
    %315 = vector.broadcast %cst_84 : f32 to vector<4x32xf32>
    %316 = arith.addf %315, %314 : vector<4x32xf32>
    %317 = arith.divf %315, %316 : vector<4x32xf32>
    %318 = arith.mulf %309, %261 : vector<4x32xf32>
    %319 = arith.mulf %303, %311 : vector<4x32xf32>
    %320 = arith.addf %318, %319 : vector<4x32xf32>
    %321 = math.tanh %320 : vector<4x32xf32>
    %322 = arith.mulf %317, %321 : vector<4x32xf32>
    %c16 = arith.constant 16 : index
    %c0_85 = arith.constant 0 : index
    %323 = vector.load %arg18[%c16, %c0_85] : memref<32x32xf32, #tpu.memory_space<vmem>>, vector<4x32xf32>
    tpu.vector_store %arg18[%c16, %c0_85], %322 {strides = array<i32>} : memref<32x32xf32, #tpu.memory_space<vmem>>, vector<4x32xf32>,
    %cst_86 = arith.constant dense<0.000000e+00> : vector<4x128xf32>
    %324 = tpu.matmul %322, %19, %cst_86 {dimension_numbers = #tpu.dot_dimension_numbers<[1], [0], [0], [1], [0, 0, 1, 1], [], []>} : vector<4x32xf32>, vector<32x128xf32>, vector<4x128xf32> -> vector<4x128xf32>
    %325 = vector.extract_strided_slice %16 {offsets = [20, 0], sizes = [4, 128], strides = [1, 1]} : vector<32x128xf32> to vector<4x128xf32>
    %cst_87 = arith.constant dense<0.000000e+00> : vector<4x128xf32>
    %326 = tpu.matmul %293, %17, %cst_87 {dimension_numbers = #tpu.dot_dimension_numbers<[1], [0], [0], [1], [0, 0, 1, 1], [], []>} : vector<4x32xf32>, vector<32x128xf32>, vector<4x128xf32> -> vector<4x128xf32>
    %327 = arith.addf %325, %326 : vector<4x128xf32>
    %328 = vector.extract_strided_slice %327 {offsets = [0, 0], sizes = [4, 32], strides = [1, 1]} : vector<4x128xf32> to vector<4x32xf32>
    %329 = arith.negf %328 : vector<4x32xf32>
    %330 = math.exp %329 : vector<4x32xf32>
    %cst_88 = arith.constant 1.000000e+00 : f32
    %331 = vector.broadcast %cst_88 : f32 to vector<4x32xf32>
    %332 = arith.addf %331, %330 : vector<4x32xf32>
    %333 = arith.divf %331, %332 : vector<4x32xf32>
    %334 = vector.extract_strided_slice %327 {offsets = [0, 32], sizes = [4, 32], strides = [1, 1]} : vector<4x128xf32> to vector<4x32xf32>
    %335 = arith.negf %334 : vector<4x32xf32>
    %336 = math.exp %335 : vector<4x32xf32>
    %cst_89 = arith.constant 1.000000e+00 : f32
    %337 = vector.broadcast %cst_89 : f32 to vector<4x32xf32>
    %338 = arith.addf %337, %336 : vector<4x32xf32>
    %339 = arith.divf %337, %338 : vector<4x32xf32>
    %340 = vector.extract_strided_slice %327 {offsets = [0, 64], sizes = [4, 32], strides = [1, 1]} : vector<4x128xf32> to vector<4x32xf32>
    %341 = math.tanh %340 : vector<4x32xf32>
    %342 = vector.extract_strided_slice %327 {offsets = [0, 96], sizes = [4, 32], strides = [1, 1]} : vector<4x128xf32> to vector<4x32xf32>
    %343 = arith.negf %342 : vector<4x32xf32>
    %344 = math.exp %343 : vector<4x32xf32>
    %cst_90 = arith.constant 1.000000e+00 : f32
    %345 = vector.broadcast %cst_90 : f32 to vector<4x32xf32>
    %346 = arith.addf %345, %344 : vector<4x32xf32>
    %347 = arith.divf %345, %346 : vector<4x32xf32>
    %348 = arith.mulf %339, %291 : vector<4x32xf32>
    %349 = arith.mulf %333, %341 : vector<4x32xf32>
    %350 = arith.addf %348, %349 : vector<4x32xf32>
    %351 = math.tanh %350 : vector<4x32xf32>
    %352 = arith.mulf %347, %351 : vector<4x32xf32>
    %cst_91 = arith.constant dense<0.000000e+00> : vector<4x128xf32>
    %353 = tpu.matmul %352, %18, %cst_91 {dimension_numbers = #tpu.dot_dimension_numbers<[1], [0], [0], [1], [0, 0, 1, 1], [], []>} : vector<4x32xf32>, vector<32x128xf32>, vector<4x128xf32> -> vector<4x128xf32>
    %354 = arith.addf %353, %324 : vector<4x128xf32>
    %355 = vector.broadcast %20 : vector<1x128xf32> to vector<4x128xf32>
    %356 = arith.addf %354, %355 : vector<4x128xf32>
    %357 = vector.extract_strided_slice %356 {offsets = [0, 0], sizes = [4, 32], strides = [1, 1]} : vector<4x128xf32> to vector<4x32xf32>
    %358 = arith.negf %357 : vector<4x32xf32>
    %359 = math.exp %358 : vector<4x32xf32>
    %cst_92 = arith.constant 1.000000e+00 : f32
    %360 = vector.broadcast %cst_92 : f32 to vector<4x32xf32>
    %361 = arith.addf %360, %359 : vector<4x32xf32>
    %362 = arith.divf %360, %361 : vector<4x32xf32>
    %363 = vector.extract_strided_slice %356 {offsets = [0, 32], sizes = [4, 32], strides = [1, 1]} : vector<4x128xf32> to vector<4x32xf32>
    %364 = arith.negf %363 : vector<4x32xf32>
    %365 = math.exp %364 : vector<4x32xf32>
    %cst_93 = arith.constant 1.000000e+00 : f32
    %366 = vector.broadcast %cst_93 : f32 to vector<4x32xf32>
    %367 = arith.addf %366, %365 : vector<4x32xf32>
    %368 = arith.divf %366, %367 : vector<4x32xf32>
    %369 = vector.extract_strided_slice %356 {offsets = [0, 64], sizes = [4, 32], strides = [1, 1]} : vector<4x128xf32> to vector<4x32xf32>
    %370 = math.tanh %369 : vector<4x32xf32>
    %371 = vector.extract_strided_slice %356 {offsets = [0, 96], sizes = [4, 32], strides = [1, 1]} : vector<4x128xf32> to vector<4x32xf32>
    %372 = arith.negf %371 : vector<4x32xf32>
    %373 = math.exp %372 : vector<4x32xf32>
    %cst_94 = arith.constant 1.000000e+00 : f32
    %374 = vector.broadcast %cst_94 : f32 to vector<4x32xf32>
    %375 = arith.addf %374, %373 : vector<4x32xf32>
    %376 = arith.divf %374, %375 : vector<4x32xf32>
    %377 = arith.mulf %368, %320 : vector<4x32xf32>
    %378 = arith.mulf %362, %370 : vector<4x32xf32>
    %379 = arith.addf %377, %378 : vector<4x32xf32>
    %380 = math.tanh %379 : vector<4x32xf32>
    %381 = arith.mulf %376, %380 : vector<4x32xf32>
    %c20 = arith.constant 20 : index
    %c0_95 = arith.constant 0 : index
    %382 = vector.load %arg18[%c20, %c0_95] : memref<32x32xf32, #tpu.memory_space<vmem>>, vector<4x32xf32>
    tpu.vector_store %arg18[%c20, %c0_95], %381 {strides = array<i32>} : memref<32x32xf32, #tpu.memory_space<vmem>>, vector<4x32xf32>,
    %cst_96 = arith.constant dense<0.000000e+00> : vector<4x128xf32>
    %383 = tpu.matmul %381, %19, %cst_96 {dimension_numbers = #tpu.dot_dimension_numbers<[1], [0], [0], [1], [0, 0, 1, 1], [], []>} : vector<4x32xf32>, vector<32x128xf32>, vector<4x128xf32> -> vector<4x128xf32>
    %384 = vector.extract_strided_slice %16 {offsets = [24, 0], sizes = [4, 128], strides = [1, 1]} : vector<32x128xf32> to vector<4x128xf32>
    %cst_97 = arith.constant dense<0.000000e+00> : vector<4x128xf32>
    %385 = tpu.matmul %352, %17, %cst_97 {dimension_numbers = #tpu.dot_dimension_numbers<[1], [0], [0], [1], [0, 0, 1, 1], [], []>} : vector<4x32xf32>, vector<32x128xf32>, vector<4x128xf32> -> vector<4x128xf32>
    %386 = arith.addf %384, %385 : vector<4x128xf32>
    %387 = vector.extract_strided_slice %386 {offsets = [0, 0], sizes = [4, 32], strides = [1, 1]} : vector<4x128xf32> to vector<4x32xf32>
    %388 = arith.negf %387 : vector<4x32xf32>
    %389 = math.exp %388 : vector<4x32xf32>
    %cst_98 = arith.constant 1.000000e+00 : f32
    %390 = vector.broadcast %cst_98 : f32 to vector<4x32xf32>
    %391 = arith.addf %390, %389 : vector<4x32xf32>
    %392 = arith.divf %390, %391 : vector<4x32xf32>
    %393 = vector.extract_strided_slice %386 {offsets = [0, 32], sizes = [4, 32], strides = [1, 1]} : vector<4x128xf32> to vector<4x32xf32>
    %394 = arith.negf %393 : vector<4x32xf32>
    %395 = math.exp %394 : vector<4x32xf32>
    %cst_99 = arith.constant 1.000000e+00 : f32
    %396 = vector.broadcast %cst_99 : f32 to vector<4x32xf32>
    %397 = arith.addf %396, %395 : vector<4x32xf32>
    %398 = arith.divf %396, %397 : vector<4x32xf32>
    %399 = vector.extract_strided_slice %386 {offsets = [0, 64], sizes = [4, 32], strides = [1, 1]} : vector<4x128xf32> to vector<4x32xf32>
    %400 = math.tanh %399 : vector<4x32xf32>
    %401 = vector.extract_strided_slice %386 {offsets = [0, 96], sizes = [4, 32], strides = [1, 1]} : vector<4x128xf32> to vector<4x32xf32>
    %402 = arith.negf %401 : vector<4x32xf32>
    %403 = math.exp %402 : vector<4x32xf32>
    %cst_100 = arith.constant 1.000000e+00 : f32
    %404 = vector.broadcast %cst_100 : f32 to vector<4x32xf32>
    %405 = arith.addf %404, %403 : vector<4x32xf32>
    %406 = arith.divf %404, %405 : vector<4x32xf32>
    %407 = arith.mulf %398, %350 : vector<4x32xf32>
    %408 = arith.mulf %392, %400 : vector<4x32xf32>
    %409 = arith.addf %407, %408 : vector<4x32xf32>
    %410 = math.tanh %409 : vector<4x32xf32>
    %411 = arith.mulf %406, %410 : vector<4x32xf32>
    %cst_101 = arith.constant dense<0.000000e+00> : vector<4x128xf32>
    %412 = tpu.matmul %411, %18, %cst_101 {dimension_numbers = #tpu.dot_dimension_numbers<[1], [0], [0], [1], [0, 0, 1, 1], [], []>} : vector<4x32xf32>, vector<32x128xf32>, vector<4x128xf32> -> vector<4x128xf32>
    %413 = arith.addf %412, %383 : vector<4x128xf32>
    %414 = vector.broadcast %20 : vector<1x128xf32> to vector<4x128xf32>
    %415 = arith.addf %413, %414 : vector<4x128xf32>
    %416 = vector.extract_strided_slice %415 {offsets = [0, 0], sizes = [4, 32], strides = [1, 1]} : vector<4x128xf32> to vector<4x32xf32>
    %417 = arith.negf %416 : vector<4x32xf32>
    %418 = math.exp %417 : vector<4x32xf32>
    %cst_102 = arith.constant 1.000000e+00 : f32
    %419 = vector.broadcast %cst_102 : f32 to vector<4x32xf32>
    %420 = arith.addf %419, %418 : vector<4x32xf32>
    %421 = arith.divf %419, %420 : vector<4x32xf32>
    %422 = vector.extract_strided_slice %415 {offsets = [0, 32], sizes = [4, 32], strides = [1, 1]} : vector<4x128xf32> to vector<4x32xf32>
    %423 = arith.negf %422 : vector<4x32xf32>
    %424 = math.exp %423 : vector<4x32xf32>
    %cst_103 = arith.constant 1.000000e+00 : f32
    %425 = vector.broadcast %cst_103 : f32 to vector<4x32xf32>
    %426 = arith.addf %425, %424 : vector<4x32xf32>
    %427 = arith.divf %425, %426 : vector<4x32xf32>
    %428 = vector.extract_strided_slice %415 {offsets = [0, 64], sizes = [4, 32], strides = [1, 1]} : vector<4x128xf32> to vector<4x32xf32>
    %429 = math.tanh %428 : vector<4x32xf32>
    %430 = vector.extract_strided_slice %415 {offsets = [0, 96], sizes = [4, 32], strides = [1, 1]} : vector<4x128xf32> to vector<4x32xf32>
    %431 = arith.negf %430 : vector<4x32xf32>
    %432 = math.exp %431 : vector<4x32xf32>
    %cst_104 = arith.constant 1.000000e+00 : f32
    %433 = vector.broadcast %cst_104 : f32 to vector<4x32xf32>
    %434 = arith.addf %433, %432 : vector<4x32xf32>
    %435 = arith.divf %433, %434 : vector<4x32xf32>
    %436 = arith.mulf %427, %379 : vector<4x32xf32>
    %437 = arith.mulf %421, %429 : vector<4x32xf32>
    %438 = arith.addf %436, %437 : vector<4x32xf32>
    %439 = math.tanh %438 : vector<4x32xf32>
    %440 = arith.mulf %435, %439 : vector<4x32xf32>
    %c24 = arith.constant 24 : index
    %c0_105 = arith.constant 0 : index
    %441 = vector.load %arg18[%c24, %c0_105] : memref<32x32xf32, #tpu.memory_space<vmem>>, vector<4x32xf32>
    tpu.vector_store %arg18[%c24, %c0_105], %440 {strides = array<i32>} : memref<32x32xf32, #tpu.memory_space<vmem>>, vector<4x32xf32>,
    %cst_106 = arith.constant dense<0.000000e+00> : vector<4x128xf32>
    %442 = tpu.matmul %440, %19, %cst_106 {dimension_numbers = #tpu.dot_dimension_numbers<[1], [0], [0], [1], [0, 0, 1, 1], [], []>} : vector<4x32xf32>, vector<32x128xf32>, vector<4x128xf32> -> vector<4x128xf32>
    %443 = vector.extract_strided_slice %16 {offsets = [28, 0], sizes = [4, 128], strides = [1, 1]} : vector<32x128xf32> to vector<4x128xf32>
    %cst_107 = arith.constant dense<0.000000e+00> : vector<4x128xf32>
    %444 = tpu.matmul %411, %17, %cst_107 {dimension_numbers = #tpu.dot_dimension_numbers<[1], [0], [0], [1], [0, 0, 1, 1], [], []>} : vector<4x32xf32>, vector<32x128xf32>, vector<4x128xf32> -> vector<4x128xf32>
    %445 = arith.addf %443, %444 : vector<4x128xf32>
    %446 = vector.extract_strided_slice %445 {offsets = [0, 0], sizes = [4, 32], strides = [1, 1]} : vector<4x128xf32> to vector<4x32xf32>
    %447 = arith.negf %446 : vector<4x32xf32>
    %448 = math.exp %447 : vector<4x32xf32>
    %cst_108 = arith.constant 1.000000e+00 : f32
    %449 = vector.broadcast %cst_108 : f32 to vector<4x32xf32>
    %450 = arith.addf %449, %448 : vector<4x32xf32>
    %451 = arith.divf %449, %450 : vector<4x32xf32>
    %452 = vector.extract_strided_slice %445 {offsets = [0, 32], sizes = [4, 32], strides = [1, 1]} : vector<4x128xf32> to vector<4x32xf32>
    %453 = arith.negf %452 : vector<4x32xf32>
    %454 = math.exp %453 : vector<4x32xf32>
    %cst_109 = arith.constant 1.000000e+00 : f32
    %455 = vector.broadcast %cst_109 : f32 to vector<4x32xf32>
    %456 = arith.addf %455, %454 : vector<4x32xf32>
    %457 = arith.divf %455, %456 : vector<4x32xf32>
    %458 = vector.extract_strided_slice %445 {offsets = [0, 64], sizes = [4, 32], strides = [1, 1]} : vector<4x128xf32> to vector<4x32xf32>
    %459 = math.tanh %458 : vector<4x32xf32>
    %460 = vector.extract_strided_slice %445 {offsets = [0, 96], sizes = [4, 32], strides = [1, 1]} : vector<4x128xf32> to vector<4x32xf32>
    %461 = arith.negf %460 : vector<4x32xf32>
    %462 = math.exp %461 : vector<4x32xf32>
    %cst_110 = arith.constant 1.000000e+00 : f32
    %463 = vector.broadcast %cst_110 : f32 to vector<4x32xf32>
    %464 = arith.addf %463, %462 : vector<4x32xf32>
    %465 = arith.divf %463, %464 : vector<4x32xf32>
    %466 = arith.mulf %457, %409 : vector<4x32xf32>
    %467 = arith.mulf %451, %459 : vector<4x32xf32>
    %468 = arith.addf %466, %467 : vector<4x32xf32>
    %469 = math.tanh %468 : vector<4x32xf32>
    %470 = arith.mulf %465, %469 : vector<4x32xf32>
    %cst_111 = arith.constant dense<0.000000e+00> : vector<4x128xf32>
    %471 = tpu.matmul %470, %18, %cst_111 {dimension_numbers = #tpu.dot_dimension_numbers<[1], [0], [0], [1], [0, 0, 1, 1], [], []>} : vector<4x32xf32>, vector<32x128xf32>, vector<4x128xf32> -> vector<4x128xf32>
    %472 = arith.addf %471, %442 : vector<4x128xf32>
    %473 = vector.broadcast %20 : vector<1x128xf32> to vector<4x128xf32>
    %474 = arith.addf %472, %473 : vector<4x128xf32>
    %475 = vector.extract_strided_slice %474 {offsets = [0, 0], sizes = [4, 32], strides = [1, 1]} : vector<4x128xf32> to vector<4x32xf32>
    %476 = arith.negf %475 : vector<4x32xf32>
    %477 = math.exp %476 : vector<4x32xf32>
    %cst_112 = arith.constant 1.000000e+00 : f32
    %478 = vector.broadcast %cst_112 : f32 to vector<4x32xf32>
    %479 = arith.addf %478, %477 : vector<4x32xf32>
    %480 = arith.divf %478, %479 : vector<4x32xf32>
    %481 = vector.extract_strided_slice %474 {offsets = [0, 32], sizes = [4, 32], strides = [1, 1]} : vector<4x128xf32> to vector<4x32xf32>
    %482 = arith.negf %481 : vector<4x32xf32>
    %483 = math.exp %482 : vector<4x32xf32>
    %cst_113 = arith.constant 1.000000e+00 : f32
    %484 = vector.broadcast %cst_113 : f32 to vector<4x32xf32>
    %485 = arith.addf %484, %483 : vector<4x32xf32>
    %486 = arith.divf %484, %485 : vector<4x32xf32>
    %487 = vector.extract_strided_slice %474 {offsets = [0, 64], sizes = [4, 32], strides = [1, 1]} : vector<4x128xf32> to vector<4x32xf32>
    %488 = math.tanh %487 : vector<4x32xf32>
    %489 = vector.extract_strided_slice %474 {offsets = [0, 96], sizes = [4, 32], strides = [1, 1]} : vector<4x128xf32> to vector<4x32xf32>
    %490 = arith.negf %489 : vector<4x32xf32>
    %491 = math.exp %490 : vector<4x32xf32>
    %cst_114 = arith.constant 1.000000e+00 : f32
    %492 = vector.broadcast %cst_114 : f32 to vector<4x32xf32>
    %493 = arith.addf %492, %491 : vector<4x32xf32>
    %494 = arith.divf %492, %493 : vector<4x32xf32>
    %495 = arith.mulf %486, %438 : vector<4x32xf32>
    %496 = arith.mulf %480, %488 : vector<4x32xf32>
    %497 = arith.addf %495, %496 : vector<4x32xf32>
    %498 = math.tanh %497 : vector<4x32xf32>
    %499 = arith.mulf %494, %498 : vector<4x32xf32>
    %c28 = arith.constant 28 : index
    %c0_115 = arith.constant 0 : index
    %500 = vector.load %arg18[%c28, %c0_115] : memref<32x32xf32, #tpu.memory_space<vmem>>, vector<4x32xf32>
    tpu.vector_store %arg18[%c28, %c0_115], %499 {strides = array<i32>} : memref<32x32xf32, #tpu.memory_space<vmem>>, vector<4x32xf32>,
    %c0_116 = arith.constant 0 : index
    %c0_117 = arith.constant 0 : index
    %c0_118 = arith.constant 0 : index
    %501 = vector.load %arg16[%c0_116, %c0_117, %c0_118] : memref<2x4x32xf32, #tpu.memory_space<vmem>>, vector<1x4x32xf32>
    %502 = vector.shape_cast %501 : vector<1x4x32xf32> to vector<4x32xf32>
    %503 = vector.shape_cast %470 : vector<4x32xf32> to vector<1x4x32xf32>
    tpu.vector_store %arg16[%c0_116, %c0_117, %c0_118], %503 {strides = array<i32>} : memref<2x4x32xf32, #tpu.memory_space<vmem>>, vector<1x4x32xf32>,
    %c1_119 = arith.constant 1 : index
    %c0_120 = arith.constant 0 : index
    %c0_121 = arith.constant 0 : index
    %504 = vector.load %arg16[%c1_119, %c0_120, %c0_121] : memref<2x4x32xf32, #tpu.memory_space<vmem>>, vector<1x4x32xf32>
    %505 = vector.shape_cast %504 : vector<1x4x32xf32> to vector<4x32xf32>
    %506 = vector.shape_cast %499 : vector<4x32xf32> to vector<1x4x32xf32>
    tpu.vector_store %arg16[%c1_119, %c0_120, %c0_121], %506 {strides = array<i32>} : memref<2x4x32xf32, #tpu.memory_space<vmem>>, vector<1x4x32xf32>,
    %c0_122 = arith.constant 0 : index
    %c0_123 = arith.constant 0 : index
    %c0_124 = arith.constant 0 : index
    %507 = vector.load %arg17[%c0_122, %c0_123, %c0_124] : memref<2x4x32xf32, #tpu.memory_space<vmem>>, vector<1x4x32xf32>
    %508 = vector.shape_cast %507 : vector<1x4x32xf32> to vector<4x32xf32>
    %509 = vector.shape_cast %468 : vector<4x32xf32> to vector<1x4x32xf32>
    tpu.vector_store %arg17[%c0_122, %c0_123, %c0_124], %509 {strides = array<i32>} : memref<2x4x32xf32, #tpu.memory_space<vmem>>, vector<1x4x32xf32>,
    %c1_125 = arith.constant 1 : index
    %c0_126 = arith.constant 0 : index
    %c0_127 = arith.constant 0 : index
    %510 = vector.load %arg17[%c1_125, %c0_126, %c0_127] : memref<2x4x32xf32, #tpu.memory_space<vmem>>, vector<1x4x32xf32>
    %511 = vector.shape_cast %510 : vector<1x4x32xf32> to vector<4x32xf32>
    %512 = vector.shape_cast %497 : vector<4x32xf32> to vector<1x4x32xf32>
    tpu.vector_store %arg17[%c1_125, %c0_126, %c0_127], %512 {strides = array<i32>} : memref<2x4x32xf32, #tpu.memory_space<vmem>>, vector<1x4x32xf32>,
    %c0_128 = arith.constant 0 : index
    %c0_129 = arith.constant 0 : index
    %513 = vector.load %arg18[%c0_128, %c0_129] : memref<32x32xf32, #tpu.memory_space<vmem>>, vector<32x32xf32>
    %c0_130 = arith.constant 0 : index
    %c0_131 = arith.constant 0 : index
    %514 = vector.load %arg11[%c0_130, %c0_131] : memref<32x64xf32, #tpu.memory_space<vmem>>, vector<32x64xf32>
    %cst_132 = arith.constant dense<0.000000e+00> : vector<32x64xf32>
    %515 = tpu.matmul %513, %514, %cst_132 {dimension_numbers = #tpu.dot_dimension_numbers<[1], [0], [0], [1], [0, 0, 1, 1], [], []>} : vector<32x32xf32>, vector<32x64xf32>, vector<32x64xf32> -> vector<32x64xf32>
    %c0_133 = arith.constant 0 : index
    %c0_134 = arith.constant 0 : index
    %516 = vector.load %arg12[%c0_133, %c0_134] : memref<1x64xf32, #tpu.memory_space<vmem>>, vector<1x64xf32>
    %517 = vector.broadcast %516 : vector<1x64xf32> to vector<32x64xf32>
    %518 = arith.addf %515, %517 : vector<32x64xf32>
    %c0_135 = arith.constant 0 : index
    %c0_136 = arith.constant 0 : index
    %519 = vector.load %arg15[%c0_135, %c0_136] : memref<32x64xf32, #tpu.memory_space<vmem>>, vector<32x64xf32>
    tpu.vector_store %arg15[%c0_135, %c0_136], %518 {strides = array<i32>} : memref<32x64xf32, #tpu.memory_space<vmem>>, vector<32x64xf32>,
    return
  }
}

</mosaic_0001>

<llo_original>
// kernel: tpu_custom_call.1
$region0: #{tpu_custom_call.1}
  #allocation0 [shape = 'u32[]', space=smem, size = 0x4, offset = 0x4, fixed_abs, tag = 'smem constant byte address 0x4 - core index']
  #allocation1 [shape = 'u32[72,128]{1,0:T(1,128)}', space=vmem, size = 0x9000, scoped, tag = 'internal scratch']
  #allocation2 [shape = 'f32[32,32]{1,0:T(8,128)}', space=vmem, size = 0x4000, scoped, tag = 'scratch operand']
  %s0 = inlined_call_operand.vmem [shape: f32[32,16], index: 0, kind: input, shape index: {}]
  %s1 = inlined_call_operand.vmem [shape: f32[32,12], index: 1, kind: input, shape index: {}]
  %s2 = inlined_call_operand.vmem [shape: f32[12,16], index: 2, kind: input, shape index: {}]
  %s3 = inlined_call_operand.vmem [shape: f32[1,16], index: 3, kind: input, shape index: {}]
  %s4 = inlined_call_operand.hbm [shape: f32[16,128], index: 4, kind: input, shape index: {}]
  %s5 = inlined_call_operand.hbm [shape: f32[16,128], index: 5, kind: input, shape index: {}]
  %s6 = inlined_call_operand.vmem [shape: f32[32,128], index: 6, kind: input, shape index: {}]
  %s7 = inlined_call_operand.hbm [shape: f32[1,128], index: 7, kind: input, shape index: {}]
  %s8 = inlined_call_operand.vmem [shape: f32[32,128], index: 8, kind: input, shape index: {}]
  %s9 = inlined_call_operand.hbm [shape: f32[32,128], index: 9, kind: input, shape index: {}]
  %s10 = inlined_call_operand.hbm [shape: f32[1,128], index: 10, kind: input, shape index: {}]
  %s11 = inlined_call_operand.hbm [shape: f32[32,64], index: 11, kind: input, shape index: {}]
  %s12 = inlined_call_operand.vmem [shape: f32[1,64], index: 12, kind: input, shape index: {}]
  %s13 = inlined_call_operand.vmem [shape: f32[2,4,32], index: 13, kind: input, shape index: {}]
  %s14 = inlined_call_operand.hbm [shape: f32[2,4,32], index: 14, kind: input, shape index: {}]
  %s15 = inlined_call_operand.hbm [shape: f32[32,64], index: 15, kind: output, shape index: {0}]
  %s16 = inlined_call_operand.hbm [shape: f32[2,4,32], index: 16, kind: output, shape index: {1}]
  %s17 = inlined_call_operand.hbm [shape: f32[2,4,32], index: 17, kind: output, shape index: {2}]
  %18 = xla_tuple %s15, %s16, %s17
  %s19 = sld [smem:[#allocation0]]
  $region114: #{tpu_custom_call.1} parent=0
    _
  %s21 = ssub.s32 1, %s19
  %s22 = scalar_select 0, %s21, %s19
  $region1: #{tpu_custom_call.1} parent=0
    #allocation3 [shape = 'u8[8192]{0}', space=vmem, size = 0x2000, scoped, tag = 'input window, operand 4, single buffered']
    #allocation4 [shape = 's32[1]{0}', space=sflag, size = 0x4, scoped, tag = 'scoped memory for tpu_custom_call.1']
    #allocation5 [shape = 's32[1]{0}', space=sflag, size = 0x4, scoped, tag = 'scoped memory for tpu_custom_call.1']
    #allocation6 [shape = 'u8[8192]{0}', space=vmem, size = 0x2000, scoped, tag = 'input window, operand 5, single buffered']
    #allocation7 [shape = 's32[1]{0}', space=sflag, size = 0x4, scoped, tag = 'scoped memory for tpu_custom_call.1']
    #allocation8 [shape = 'u8[512]{0}', space=vmem, size = 0x400, scoped, tag = 'input window, operand 7, single buffered']
    #allocation9 [shape = 'u8[16384]{0}', space=vmem, size = 0x4000, scoped, tag = 'input window, operand 9, single buffered']
    #allocation10 [shape = 's32[1]{0}', space=sflag, size = 0x4, scoped, tag = 'scoped memory for tpu_custom_call.1']
    #allocation11 [shape = 'u8[512]{0}', space=vmem, size = 0x400, scoped, tag = 'input window, operand 10, single buffered']
    #allocation12 [shape = 'u8[16384]{0}', space=vmem, size = 0x4000, scoped, tag = 'input window, operand 11, single buffered']
    #allocation13 [shape = 's32[1]{0}', space=sflag, size = 0x4, scoped, tag = 'scoped memory for tpu_custom_call.1']
    #allocation14 [shape = 'u8[4096]{0}', space=vmem, size = 0x1000, scoped, tag = 'input window, operand 14, single buffered']
    #allocation15 [shape = 'u8[16384]{0}', space=vmem, size = 0x4000, scoped, tag = 'output window, operand 0, single buffered']
    #allocation16 [shape = 'u8[4096]{0}', space=vmem, size = 0x1000, scoped, tag = 'output window, operand 1, single buffered']
    #allocation17 [shape = 's32[1]{0}', space=sflag, size = 0x4, scoped, tag = 'scoped memory for tpu_custom_call.1']
    #allocation18 [shape = 'u8[4096]{0}', space=vmem, size = 0x1000, scoped, tag = 'output window, operand 2, single buffered']
    %23 = vsyncpa [#allocation4], 0
    %24 = vsyncpa [#allocation7], 0
    %25 = vsyncpa [#allocation10], 0
    %26 = vsyncpa [#allocation13], 0
    %27 = vsyncpa [#allocation5], 0
    %28 = vsyncpa [#allocation17], 0
    // Predicated region
    $region2: #{tpu_custom_call.1} parent=1 // pred_check
      _
    $region3: #{tpu_custom_call.1} parent=1 // pred_check_branch
      %30 = sbr.rel (0) target = $region5
    $region4: #{tpu_custom_call.1} parent=1 // pred_region
      _
    $region5: #{tpu_custom_call.1} parent=1 // pred_fallthru
      _
    // Predicated region
    $region6: #{tpu_custom_call.1} parent=1 // pred_check
      _
    $region7: #{tpu_custom_call.1} parent=1 // pred_check_branch
      %32 = sbr.rel (0) target = $region9
    $region8: #{tpu_custom_call.1} parent=1 // pred_region
      _
    $region9: #{tpu_custom_call.1} parent=1 // pred_fallthru
      _
    // Predicated region
    $region10: #{tpu_custom_call.1} parent=1 // pred_check
      _
    $region11: #{tpu_custom_call.1} parent=1 // pred_check_branch
      %34 = sbr.rel (0) target = $region13
    $region12: #{tpu_custom_call.1} parent=1 // pred_region
      _
    $region13: #{tpu_custom_call.1} parent=1 // pred_fallthru
      _
    // Predicated region
    $region14: #{tpu_custom_call.1} parent=1 // pred_check
      _
    $region15: #{tpu_custom_call.1} parent=1 // pred_check_branch
      %36 = sbr.rel (0) target = $region17
    $region16: #{tpu_custom_call.1} parent=1 // pred_region
      _
    $region17: #{tpu_custom_call.1} parent=1 // pred_fallthru
      _
    // Predicated region
    $region18: #{tpu_custom_call.1} parent=1 // pred_check
      _
    $region19: #{tpu_custom_call.1} parent=1 // pred_check_branch
      %38 = sbr.rel (0) target = $region21
    $region20: #{tpu_custom_call.1} parent=1 // pred_region
      %40 = vsyncadd [#allocation4], 0
      %s41 = sshll.u32 %s4, 4
      %s42 = int_to_ptr.hbm [resolvable:$true] %s41
      %s43 = sshll.u32 [#allocation3], 4
      %s44 = int_to_ptr.vmem [resolvable:$true] %s43
      %49 = dma.hbm_to_vmem [thread:$0]  %s42, 256, %s44, [#allocation4], 128, 128, 8
    $region21: #{tpu_custom_call.1} parent=1 // pred_fallthru
      _
    // Predicated region
    $region22: #{tpu_custom_call.1} parent=1 // pred_check
      _
    $region23: #{tpu_custom_call.1} parent=1 // pred_check_branch
      %51 = sbr.rel (0) target = $region25
    $region24: #{tpu_custom_call.1} parent=1 // pred_region
      %53 = vsyncadd [#allocation7], 0
      %s54 = sshll.u32 %s5, 4
      %s55 = int_to_ptr.hbm [resolvable:$true] %s54
      %s56 = sshll.u32 [#allocation6], 4
      %s57 = int_to_ptr.vmem [resolvable:$true] %s56
      %62 = dma.hbm_to_vmem [thread:$0]  %s55, 256, %s57, [#allocation7], 128, 128, 8
    $region25: #{tpu_custom_call.1} parent=1 // pred_fallthru
      _
    // Predicated region
    $region26: #{tpu_custom_call.1} parent=1 // pred_check
      _
    $region27: #{tpu_custom_call.1} parent=1 // pred_check_branch
      %64 = sbr.rel (0) target = $region29
    $region28: #{tpu_custom_call.1} parent=1 // pred_region
      _
    $region29: #{tpu_custom_call.1} parent=1 // pred_fallthru
      _
    // Predicated region
    $region30: #{tpu_custom_call.1} parent=1 // pred_check
      _
    $region31: #{tpu_custom_call.1} parent=1 // pred_check_branch
      %66 = sbr.rel (0) target = $region33
    $region32: #{tpu_custom_call.1} parent=1 // pred_region
      %68 = vsyncadd [#allocation7], 0
      %s70 = sshll.u32 %s7, 4
      %s71 = int_to_ptr.hbm [resolvable:$true] %s70
      %s72 = sshll.u32 [#allocation8], 4
      %s73 = int_to_ptr.vmem [resolvable:$true] %s72
      %75 = dma.hbm_to_vmem [thread:$0]  %s71, 16, %s73, [#allocation7]
    $region33: #{tpu_custom_call.1} parent=1 // pred_fallthru
      _
    // Predicated region
    $region34: #{tpu_custom_call.1} parent=1 // pred_check
      _
    $region35: #{tpu_custom_call.1} parent=1 // pred_check_branch
      %77 = sbr.rel (0) target = $region37
    $region36: #{tpu_custom_call.1} parent=1 // pred_region
      _
    $region37: #{tpu_custom_call.1} parent=1 // pred_fallthru
      _
    // Predicated region
    $region38: #{tpu_custom_call.1} parent=1 // pred_check
      _
    $region39: #{tpu_custom_call.1} parent=1 // pred_check_branch
      %79 = sbr.rel (0) target = $region41
    $region40: #{tpu_custom_call.1} parent=1 // pred_region
      %81 = vsyncadd [#allocation10], 0
      %s82 = sshll.u32 %s9, 4
      %s83 = int_to_ptr.hbm [resolvable:$true] %s82
      %s84 = sshll.u32 [#allocation9], 4
      %s85 = int_to_ptr.vmem [resolvable:$true] %s84
      %90 = dma.hbm_to_vmem [thread:$0]  %s83, 512, %s85, [#allocation10], 128, 128, 8
    $region41: #{tpu_custom_call.1} parent=1 // pred_fallthru
      _
    // Predicated region
    $region42: #{tpu_custom_call.1} parent=1 // pred_check
      _
    $region43: #{tpu_custom_call.1} parent=1 // pred_check_branch
      %92 = sbr.rel (0) target = $region45
    $region44: #{tpu_custom_call.1} parent=1 // pred_region
      %94 = vsyncadd [#allocation10], 0
      %s96 = sshll.u32 %s10, 4
      %s97 = int_to_ptr.hbm [resolvable:$true] %s96
      %s98 = sshll.u32 [#allocation11], 4
      %s99 = int_to_ptr.vmem [resolvable:$true] %s98
      %101 = dma.hbm_to_vmem [thread:$0]  %s97, 16, %s99, [#allocation10]
    $region45: #{tpu_custom_call.1} parent=1 // pred_fallthru
      _
    // Predicated region
    $region46: #{tpu_custom_call.1} parent=1 // pred_check
      _
    $region47: #{tpu_custom_call.1} parent=1 // pred_check_branch
      %103 = sbr.rel (0) target = $region49
    $region48: #{tpu_custom_call.1} parent=1 // pred_region
      %105 = vsyncadd [#allocation13], 0
      %s106 = sshll.u32 %s11, 4
      %s107 = int_to_ptr.hbm [resolvable:$true] %s106
      %s108 = sshll.u32 [#allocation12], 4
      %s109 = int_to_ptr.vmem [resolvable:$true] %s108
      %114 = dma.hbm_to_vmem [thread:$0]  %s107, 512, %s109, [#allocation13], 128, 128, 8
    $region49: #{tpu_custom_call.1} parent=1 // pred_fallthru
      _
    // Predicated region
    $region50: #{tpu_custom_call.1} parent=1 // pred_check
      _
    $region51: #{tpu_custom_call.1} parent=1 // pred_check_branch
      %116 = sbr.rel (0) target = $region53
    $region52: #{tpu_custom_call.1} parent=1 // pred_region
      _
    $region53: #{tpu_custom_call.1} parent=1 // pred_fallthru
      _
    // Predicated region
    $region54: #{tpu_custom_call.1} parent=1 // pred_check
      _
    $region55: #{tpu_custom_call.1} parent=1 // pred_check_branch
      %118 = sbr.rel (0) target = $region57
    $region56: #{tpu_custom_call.1} parent=1 // pred_region
      _
    $region57: #{tpu_custom_call.1} parent=1 // pred_fallthru
      _
    // Predicated region
    $region58: #{tpu_custom_call.1} parent=1 // pred_check
      _
    $region59: #{tpu_custom_call.1} parent=1 // pred_check_branch
      %120 = sbr.rel (0) target = $region61
    $region60: #{tpu_custom_call.1} parent=1 // pred_region
      %122 = vsyncadd [#allocation13], 0
      %s123 = sshll.u32 %s14, 4
      %s124 = int_to_ptr.hbm [resolvable:$true] %s123
      %s125 = sshll.u32 [#allocation14], 4
      %s126 = int_to_ptr.vmem [resolvable:$true] %s125
      %131 = dma.hbm_to_vmem [thread:$0]  %s124, 128, %s126, [#allocation13], 64, 64, 4
    $region61: #{tpu_custom_call.1} parent=1 // pred_fallthru
      _
    // Predicated region
    $region62: #{tpu_custom_call.1} parent=1 // pred_check
      _
    $region63: #{tpu_custom_call.1} parent=1 // pred_check_branch
      %133 = sbr.rel (0) target = $region65
    $region64: #{tpu_custom_call.1} parent=1 // pred_region
      %135 = dma.done [#allocation4], 256
    $region65: #{tpu_custom_call.1} parent=1 // pred_fallthru
      _
    // Predicated region
    $region66: #{tpu_custom_call.1} parent=1 // pred_check
      _
    $region67: #{tpu_custom_call.1} parent=1 // pred_check_branch
      %137 = sbr.rel (0) target = $region69
    $region68: #{tpu_custom_call.1} parent=1 // pred_region
      %139 = dma.done [#allocation7], 256
    $region69: #{tpu_custom_call.1} parent=1 // pred_fallthru
      _
    // Predicated region
    $region70: #{tpu_custom_call.1} parent=1 // pred_check
      _
    $region71: #{tpu_custom_call.1} parent=1 // pred_check_branch
      %141 = sbr.rel (0) target = $region73
    $region72: #{tpu_custom_call.1} parent=1 // pred_region
      %143 = dma.done [#allocation7], 16
    $region73: #{tpu_custom_call.1} parent=1 // pred_fallthru
      _
    // Predicated region
    $region74: #{tpu_custom_call.1} parent=1 // pred_check
      _
    $region75: #{tpu_custom_call.1} parent=1 // pred_check_branch
      %145 = sbr.rel (0) target = $region77
    $region76: #{tpu_custom_call.1} parent=1 // pred_region
      %147 = dma.done [#allocation10], 512
    $region77: #{tpu_custom_call.1} parent=1 // pred_fallthru
      _
    // Predicated region
    $region78: #{tpu_custom_call.1} parent=1 // pred_check
      _
    $region79: #{tpu_custom_call.1} parent=1 // pred_check_branch
      %149 = sbr.rel (0) target = $region81
    $region80: #{tpu_custom_call.1} parent=1 // pred_region
      %151 = dma.done [#allocation10], 16
    $region81: #{tpu_custom_call.1} parent=1 // pred_fallthru
      _
    // Predicated region
    $region82: #{tpu_custom_call.1} parent=1 // pred_check
      _
    $region83: #{tpu_custom_call.1} parent=1 // pred_check_branch
      %153 = sbr.rel (0) target = $region85
    $region84: #{tpu_custom_call.1} parent=1 // pred_region
      %155 = dma.done [#allocation13], 512
    $region85: #{tpu_custom_call.1} parent=1 // pred_fallthru
      _
    // Predicated region
    $region86: #{tpu_custom_call.1} parent=1 // pred_check
      _
    $region87: #{tpu_custom_call.1} parent=1 // pred_check_branch
      %157 = sbr.rel (0) target = $region89
    $region88: #{tpu_custom_call.1} parent=1 // pred_region
      %159 = dma.done [#allocation13], 128
    $region89: #{tpu_custom_call.1} parent=1 // pred_fallthru
      _
    %v160 = vld [vmem:[%s1] sm:$0xff]
    %v161 = vld [vmem:[%s1 + $0x8] sm:$0xff]
    %v162 = vld [vmem:[%s1 + $0x10] sm:$0xff]
    %v163 = vld [vmem:[%s1 + $0x18] sm:$0xff]
    %v164 = vld [vmem:[%s2] sm:$0xff]
    %v165 = vld [vmem:[%s2 + $0x8] sm:$0xf]
    %v166 = vld [vmem:[%s3] sm:$0x1]
    %v168 = vperm.slane %v166, 0
    %vm170 = vcmask 97280
    %v172 = vsel %vm170, %v160, 0
    %v175 = vsel %vm170, %v161, 0
    %v178 = vsel %vm170, %v162, 0
    %v181 = vsel %vm170, %v163, 0
    %vm183 = vcmask 1043456
    %v185 = vsel %vm183, %v165, 0
    %187 = vmatpush.msra.mxu0 0.0
    %188 = vmatpush.msra.mxu0 0.0
    %189 = vmatpush.msra.mxu0 0.0
    %190 = vmatpush.msra.mxu0 0.0
    %191 = vmatpush.msra.mxu0 0.0
    %192 = vmatpush.msra.mxu0 0.0
    %193 = vmatpush.msra.mxu0 0.0
    %194 = vmatpush.msra.mxu0 0.0
    %195 = vmatpush.msra.mxu0 0.0
    %196 = vmatpush.msra.mxu0 0.0
    %197 = vmatpush.msra.mxu0 0.0
    %198 = vmatpush.msra.mxu0 0.0
    %199 = vmatpush.msra.mxu0 0.0
    %200 = vmatpush.msra.mxu0 0.0
    %201 = vmatpush.msra.mxu0 %v185
    %202 = vmatpush.msra.mxu0 %v164
    %203 = vmatmul.f32.gmra.mxu0 %v172
    %v204 = vpop.f32.mrf.mxu0
    %v205 = vadd.f32 %v168, %v204
    %206 = vmatmul.f32.gmra.mxu0 %v175
    %v207 = vpop.f32.mrf.mxu0
    %v208 = vadd.f32 %v168, %v207
    %209 = vmatmul.f32.gmra.mxu0 %v178
    %v210 = vpop.f32.mrf.mxu0
    %v211 = vadd.f32 %v168, %v210
    %212 = vmatmul.f32.gmra.mxu0 %v181
    %v213 = vpop.f32.mrf.mxu0
    %v214 = vadd.f32 %v168, %v213
    %215 = vdwg.mxu0
    %v216 = vmax.f32 %v205, 0.0
    %v217 = vmax.f32 %v208, 0.0
    %v218 = vmax.f32 %v211, 0.0
    %v219 = vmax.f32 %v214, 0.0
    %v220 = vld [vmem:[#allocation3] sm:$0xff]
    %v221 = vld [vmem:[#allocation3 + $0x8] sm:$0xff]
    %v222 = vld [vmem:[%s0] sm:$0xff]
    %v223 = vld [vmem:[%s0 + $0x8] sm:$0xff]
    %v224 = vld [vmem:[%s0 + $0x10] sm:$0xff]
    %v225 = vld [vmem:[%s0 + $0x18] sm:$0xff]
    %v226 = vld [vmem:[#allocation6] sm:$0xff]
    %v227 = vld [vmem:[#allocation6 + $0x8] sm:$0xff]
    %vm228 = vcmask 130048
    %v230 = vsel %vm228, %v222, 0
    %v233 = vsel %vm228, %v223, 0
    %v236 = vsel %vm228, %v224, 0
    %v239 = vsel %vm228, %v225, 0
    %241 = vmatpush.msra.mxu0 0.0
    %242 = vmatpush.msra.mxu0 0.0
    %243 = vmatpush.msra.mxu0 0.0
    %244 = vmatpush.msra.mxu0 0.0
    %245 = vmatpush.msra.mxu0 0.0
    %246 = vmatpush.msra.mxu0 0.0
    %247 = vmatpush.msra.mxu0 0.0
    %248 = vmatpush.msra.mxu0 0.0
    %249 = vmatpush.msra.mxu0 0.0
    %250 = vmatpush.msra.mxu0 0.0
    %251 = vmatpush.msra.mxu0 0.0
    %252 = vmatpush.msra.mxu0 0.0
    %253 = vmatpush.msra.mxu0 0.0
    %254 = vmatpush.msra.mxu0 0.0
    %255 = vmatpush.msra.mxu0 %v227
    %256 = vmatpush.msra.mxu0 %v226
    %257 = vmatmul.f32.gmra.mxu0 %v230
    %v258 = vpop.f32.mrf.mxu0
    %v259 = vadd.f32 0.0, %v258
    %260 = vmatmul.f32.gmra.mxu0 %v233
    %v261 = vpop.f32.mrf.mxu0
    %v262 = vadd.f32 0.0, %v261
    %263 = vmatmul.f32.gmra.mxu0 %v236
    %v264 = vpop.f32.mrf.mxu0
    %v265 = vadd.f32 0.0, %v264
    %266 = vmatmul.f32.gmra.mxu0 %v239
    %v267 = vpop.f32.mrf.mxu0
    %v268 = vadd.f32 0.0, %v267
    %269 = vdwg.mxu0
    %v271 = vsel %vm228, %v216, 0
    %v274 = vsel %vm228, %v217, 0
    %v277 = vsel %vm228, %v218, 0
    %v280 = vsel %vm228, %v219, 0
    %282 = vmatpush.msra.mxu0 0.0
    %283 = vmatpush.msra.mxu0 0.0
    %284 = vmatpush.msra.mxu0 0.0
    %285 = vmatpush.msra.mxu0 0.0
    %286 = vmatpush.msra.mxu0 0.0
    %287 = vmatpush.msra.mxu0 0.0
    %288 = vmatpush.msra.mxu0 0.0
    %289 = vmatpush.msra.mxu0 0.0
    %290 = vmatpush.msra.mxu0 0.0
    %291 = vmatpush.msra.mxu0 0.0
    %292 = vmatpush.msra.mxu0 0.0
    %293 = vmatpush.msra.mxu0 0.0
    %294 = vmatpush.msra.mxu0 0.0
    %295 = vmatpush.msra.mxu0 0.0
    %296 = vmatpush.msra.mxu0 %v221
    %297 = vmatpush.msra.mxu0 %v220
    %298 = vmatmul.f32.gmra.mxu0 %v271
    %v299 = vpop.f32.mrf.mxu0
    %v300 = vadd.f32 %v259, %v299
    %301 = vmatmul.f32.gmra.mxu0 %v274
    %v302 = vpop.f32.mrf.mxu0
    %v303 = vadd.f32 %v262, %v302
    %304 = vmatmul.f32.gmra.mxu0 %v277
    %v305 = vpop.f32.mrf.mxu0
    %v306 = vadd.f32 %v265, %v305
    %307 = vmatmul.f32.gmra.mxu0 %v280
    %v308 = vpop.f32.mrf.mxu0
    %v309 = vadd.f32 %v268, %v308
    %310 = vdwg.mxu0
    %v311 = vld [vmem:[#allocation8] sm:$0x1]
    %v313 = vperm.slane %v311, 0
    %v315 = vadd.f32 %v300, %v313
    %v316 = vadd.f32 %v303, %v313
    %v317 = vadd.f32 %v306, %v313
    %v318 = vadd.f32 %v309, %v313
    %v319 = vld [vmem:[%s6] sm:$0xff]
    %v320 = vld [vmem:[%s6 + $0x8] sm:$0xff]
    %v321 = vld [vmem:[%s6 + $0x10] sm:$0xff]
    %v322 = vld [vmem:[%s6 + $0x18] sm:$0xff]
    %v323 = vld [vmem:[%s8] sm:$0xff]
    %v324 = vld [vmem:[%s8 + $0x8] sm:$0xff]
    %v325 = vld [vmem:[%s8 + $0x10] sm:$0xff]
    %v326 = vld [vmem:[%s8 + $0x18] sm:$0xff]
    %v327 = vld [vmem:[#allocation9] sm:$0xff]
    %v328 = vld [vmem:[#allocation9 + $0x8] sm:$0xff]
    %v329 = vld [vmem:[#allocation9 + $0x10] sm:$0xff]
    %v330 = vld [vmem:[#allocation9 + $0x18] sm:$0xff]
    %v331 = vld [vmem:[#allocation11] sm:$0x1]
    %v332 = vld [vmem:[%s13] sm:$0xf]
    %v333 = vld [vmem:[#allocation14] sm:$0xf]
    %s334 = scalar_lea.vmem %s13, 4
    %v335 = vld [vmem:[%s334] sm:$0xf]
    %s336 = scalar_lea.vmem [#allocation14], 4
    %v337 = vld [vmem:[%s336] sm:$0xf]
    %vm338 = vcmask 261120
    %v340 = vsel %vm338, %v335, 0
    %342 = vmatpush.msra.mxu0 0.0
    %343 = vmatpush.msra.mxu0 0.0
    %344 = vmatpush.msra.mxu0 0.0
    %345 = vmatpush.msra.mxu0 0.0
    %346 = vmatpush.msra.mxu0 0.0
    %347 = vmatpush.msra.mxu0 0.0
    %348 = vmatpush.msra.mxu0 0.0
    %349 = vmatpush.msra.mxu0 0.0
    %350 = vmatpush.msra.mxu0 0.0
    %351 = vmatpush.msra.mxu0 0.0
    %352 = vmatpush.msra.mxu0 0.0
    %353 = vmatpush.msra.mxu0 0.0
    %354 = vmatpush.msra.mxu0 %v330
    %355 = vmatpush.msra.mxu0 %v329
    %356 = vmatpush.msra.mxu0 %v328
    %357 = vmatpush.msra.mxu0 %v327
    %358 = vmatmul.f32.gmra.mxu0 %v340
    %v359 = vpop.f32.mrf.mxu0
    %v360 = vadd.f32 0.0, %v359
    %361 = vdwg.mxu0
    %v363 = vsel %vm338, %v332, 0
    %365 = vmatpush.msra.mxu0 0.0
    %366 = vmatpush.msra.mxu0 0.0
    %367 = vmatpush.msra.mxu0 0.0
    %368 = vmatpush.msra.mxu0 0.0
    %369 = vmatpush.msra.mxu0 0.0
    %370 = vmatpush.msra.mxu0 0.0
    %371 = vmatpush.msra.mxu0 0.0
    %372 = vmatpush.msra.mxu0 0.0
    %373 = vmatpush.msra.mxu0 0.0
    %374 = vmatpush.msra.mxu0 0.0
    %375 = vmatpush.msra.mxu0 0.0
    %376 = vmatpush.msra.mxu0 0.0
    %377 = vmatpush.msra.mxu0 %v322
    %378 = vmatpush.msra.mxu0 %v321
    %379 = vmatpush.msra.mxu0 %v320
    %380 = vmatpush.msra.mxu0 %v319
    %381 = vmatmul.f32.gmra.mxu0 %v363
    %v382 = vpop.f32.mrf.mxu0
    %v383 = vadd.f32 0.0, %v382
    %384 = vdwg.mxu0
    %v385 = vadd.f32 %v315, %v383
    %v386 = vxor.u32 %v385, 2147483648
    %v387 = vmul.f32 %v386, 1.442695
    %v388 = vpow.pop %v387
    %v389 = vadd.f32 %v388, 1.0
    %v390 = vrcp.pop %v389
    %v391 = vmul.f32 %v389, %v390
    %v392 = vsub.f32 1.0, %v391
    %v393 = vmul.f32 %v390, %v392
    %v394 = vadd.f32 %v390, %v393
    %vm395 = vweird.f32 %v389
    %vm396 = vweird.f32 %v390
    %vm397 = vmor %vm395, %vm396
    %v398 = vsel %vm397, %v390, %v394
    %v399 = vand.u32 2147483647, %v389
    %vm400 = vcmp.eq.f32.partialorder %v399, 8.507059e+37
    %v401 = vand.u32 %v389, 2147483648
    %v402 = vor.u32 1.1754944e-38, %v401
    %v403 = vsel %vm400, %v402, %v398
    %v404 = vmul.f32 1.0, %v403
    %v405 = vtanh.pop %v385
    %407 = vrot.lane.b32.xlu0 %v333, 32
    %v408 = vpop.permute.xlu0 %407
    %v410 = vmul.f32 %v404, %v408
    %412 = vrot.lane.b32.xlu0 %v405, 64
    %v413 = vpop.permute.xlu0 %412
    %v415 = vmul.f32 %v404, %v413
    %417 = vrot.lane.b32.xlu0 %v415, 32
    %v418 = vpop.permute.xlu0 %417
    %v420 = vadd.f32 %v410, %v418
    %v421 = vtanh.pop %v420
    %423 = vrot.lane.b32.xlu0 %v421, 64
    %v424 = vpop.permute.xlu0 %423
    %v426 = vmul.f32 %v404, %v424
    %428 = vrot.lane.b32.xlu0 %v426, 32
    %v429 = vpop.permute.xlu0 %428
    %v430 = vsel %vm338, %v429, 0
    %432 = vmatpush.msra.mxu0 0.0
    %433 = vmatpush.msra.mxu0 0.0
    %434 = vmatpush.msra.mxu0 0.0
    %435 = vmatpush.msra.mxu0 0.0
    %436 = vmatpush.msra.mxu0 0.0
    %437 = vmatpush.msra.mxu0 0.0
    %438 = vmatpush.msra.mxu0 0.0
    %439 = vmatpush.msra.mxu0 0.0
    %440 = vmatpush.msra.mxu0 0.0
    %441 = vmatpush.msra.mxu0 0.0
    %442 = vmatpush.msra.mxu0 0.0
    %443 = vmatpush.msra.mxu0 0.0
    %444 = vmatpush.msra.mxu0 %v326
    %445 = vmatpush.msra.mxu0 %v325
    %446 = vmatpush.msra.mxu0 %v324
    %447 = vmatpush.msra.mxu0 %v323
    %448 = vmatmul.f32.gmra.mxu0 %v430
    %v449 = vpop.f32.mrf.mxu0
    %v450 = vadd.f32 %v360, %v449
    %451 = vdwg.mxu0
    %v453 = vperm.slane %v331, 0
    %v455 = vadd.f32 %v450, %v453
    %v456 = vxor.u32 %v455, 2147483648
    %v457 = vmul.f32 %v456, 1.442695
    %v458 = vpow.pop %v457
    %v459 = vadd.f32 %v458, 1.0
    %v460 = vrcp.pop %v459
    %v461 = vmul.f32 %v459, %v460
    %v462 = vsub.f32 1.0, %v461
    %v463 = vmul.f32 %v460, %v462
    %v464 = vadd.f32 %v460, %v463
    %vm465 = vweird.f32 %v459
    %vm466 = vweird.f32 %v460
    %vm467 = vmor %vm465, %vm466
    %v468 = vsel %vm467, %v460, %v464
    %v469 = vand.u32 2147483647, %v459
    %vm470 = vcmp.eq.f32.partialorder %v469, 8.507059e+37
    %v471 = vand.u32 %v459, 2147483648
    %v472 = vor.u32 1.1754944e-38, %v471
    %v473 = vsel %vm470, %v472, %v468
    %v474 = vmul.f32 1.0, %v473
    %v475 = vtanh.pop %v455
    %477 = vrot.lane.b32.xlu0 %v337, 32
    %v478 = vpop.permute.xlu0 %477
    %v480 = vmul.f32 %v474, %v478
    %482 = vrot.lane.b32.xlu0 %v475, 64
    %v483 = vpop.permute.xlu0 %482
    %v485 = vmul.f32 %v474, %v483
    %487 = vrot.lane.b32.xlu0 %v485, 32
    %v488 = vpop.permute.xlu0 %487
    %v490 = vadd.f32 %v480, %v488
    %v491 = vtanh.pop %v490
    %493 = vrot.lane.b32.xlu0 %v491, 64
    %v494 = vpop.permute.xlu0 %493
    %v496 = vmul.f32 %v474, %v494
    %498 = vrot.lane.b32.xlu0 %v496, 32
    %v499 = vpop.permute.xlu0 %498
    %vm501 = vcmask 257024
    %502 = vst.msk [vmem:[#allocation2] sm:$0xf] %vm501, %v499
    %v503 = vsel %vm338, %v499, 0
    %505 = vmatpush.msra.mxu0 0.0
    %506 = vmatpush.msra.mxu0 0.0
    %507 = vmatpush.msra.mxu0 0.0
    %508 = vmatpush.msra.mxu0 0.0
    %509 = vmatpush.msra.mxu0 0.0
    %510 = vmatpush.msra.mxu0 0.0
    %511 = vmatpush.msra.mxu0 0.0
    %512 = vmatpush.msra.mxu0 0.0
    %513 = vmatpush.msra.mxu0 0.0
    %514 = vmatpush.msra.mxu0 0.0
    %515 = vmatpush.msra.mxu0 0.0
    %516 = vmatpush.msra.mxu0 0.0
    %517 = vmatpush.msra.mxu0 %v330
    %518 = vmatpush.msra.mxu0 %v329
    %519 = vmatpush.msra.mxu0 %v328
    %520 = vmatpush.msra.mxu0 %v327
    %521 = vmatmul.f32.gmra.mxu0 %v503
    %v522 = vpop.f32.mrf.mxu0
    %v523 = vadd.f32 0.0, %v522
    %524 = vdwg.mxu0
    %525 = vmatpush.msra.mxu0 0.0
    %526 = vmatpush.msra.mxu0 0.0
    %527 = vmatpush.msra.mxu0 0.0
    %528 = vmatpush.msra.mxu0 0.0
    %529 = vmatpush.msra.mxu0 0.0
    %530 = vmatpush.msra.mxu0 0.0
    %531 = vmatpush.msra.mxu0 0.0
    %532 = vmatpush.msra.mxu0 0.0
    %533 = vmatpush.msra.mxu0 0.0
    %534 = vmatpush.msra.mxu0 0.0
    %535 = vmatpush.msra.mxu0 0.0
    %536 = vmatpush.msra.mxu0 0.0
    %537 = vmatpush.msra.mxu0 %v322
    %538 = vmatpush.msra.mxu0 %v321
    %539 = vmatpush.msra.mxu0 %v320
    %540 = vmatpush.msra.mxu0 %v319
    %541 = vmatmul.f32.gmra.mxu0 %v430
    %v542 = vpop.f32.mrf.mxu0
    %v543 = vadd.f32 0.0, %v542
    %544 = vdwg.mxu0
    %v546 = vrot.slane %v543, 4
    %v548 = vadd.f32 %v315, %v546
    %v549 = vxor.u32 %v548, 2147483648
    %v550 = vmul.f32 %v549, 1.442695
    %v551 = vpow.pop %v550
    %v552 = vadd.f32 %v551, 1.0
    %v553 = vrcp.pop %v552
    %v554 = vmul.f32 %v552, %v553
    %v555 = vsub.f32 1.0, %v554
    %v556 = vmul.f32 %v553, %v555
    %v557 = vadd.f32 %v553, %v556
    %vm558 = vweird.f32 %v552
    %vm559 = vweird.f32 %v553
    %vm560 = vmor %vm558, %vm559
    %v561 = vsel %vm560, %v553, %v557
    %v562 = vand.u32 2147483647, %v552
    %vm563 = vcmp.eq.f32.partialorder %v562, 8.507059e+37
    %v564 = vand.u32 %v552, 2147483648
    %v565 = vor.u32 1.1754944e-38, %v564
    %v566 = vsel %vm563, %v565, %v561
    %v567 = vmul.f32 1.0, %v566
    %v568 = vtanh.pop %v548
    %v570 = vrot.slane %v420, 4
    %v572 = vmul.f32 %v567, %v570
    %574 = vrot.lane.b32.xlu0 %v568, 64
    %v575 = vpop.permute.xlu0 %574
    %v577 = vmul.f32 %v567, %v575
    %579 = vrot.lane.b32.xlu0 %v577, 32
    %v580 = vpop.permute.xlu0 %579
    %v582 = vadd.f32 %v572, %v580
    %v583 = vtanh.pop %v582
    %585 = vrot.lane.b32.xlu0 %v583, 64
    %v586 = vpop.permute.xlu0 %585
    %v588 = vmul.f32 %v567, %v586
    %v590 = vrot.slane %v588, 4
    %591 = vrot.lane.b32.xlu0 %v590, 32
    %v592 = vpop.permute.xlu0 %591
    %v593 = vsel %vm338, %v592, 0
    %595 = vmatpush.msra.mxu0 0.0
    %596 = vmatpush.msra.mxu0 0.0
    %597 = vmatpush.msra.mxu0 0.0
    %598 = vmatpush.msra.mxu0 0.0
    %599 = vmatpush.msra.mxu0 0.0
    %600 = vmatpush.msra.mxu0 0.0
    %601 = vmatpush.msra.mxu0 0.0
    %602 = vmatpush.msra.mxu0 0.0
    %603 = vmatpush.msra.mxu0 0.0
    %604 = vmatpush.msra.mxu0 0.0
    %605 = vmatpush.msra.mxu0 0.0
    %606 = vmatpush.msra.mxu0 0.0
    %607 = vmatpush.msra.mxu0 %v326
    %608 = vmatpush.msra.mxu0 %v325
    %609 = vmatpush.msra.mxu0 %v324
    %610 = vmatpush.msra.mxu0 %v323
    %611 = vmatmul.f32.gmra.mxu0 %v593
    %v612 = vpop.f32.mrf.mxu0
    %v613 = vadd.f32 %v523, %v612
    %614 = vdwg.mxu0
    %v615 = vadd.f32 %v613, %v453
    %v616 = vxor.u32 %v615, 2147483648
    %v617 = vmul.f32 %v616, 1.442695
    %v618 = vpow.pop %v617
    %v619 = vadd.f32 %v618, 1.0
    %v620 = vrcp.pop %v619
    %v621 = vmul.f32 %v619, %v620
    %v622 = vsub.f32 1.0, %v621
    %v623 = vmul.f32 %v620, %v622
    %v624 = vadd.f32 %v620, %v623
    %vm625 = vweird.f32 %v619
    %vm626 = vweird.f32 %v620
    %vm627 = vmor %vm625, %vm626
    %v628 = vsel %vm627, %v620, %v624
    %v629 = vand.u32 2147483647, %v619
    %vm630 = vcmp.eq.f32.partialorder %v629, 8.507059e+37
    %v631 = vand.u32 %v619, 2147483648
    %v632 = vor.u32 1.1754944e-38, %v631
    %v633 = vsel %vm630, %v632, %v628
    %v634 = vmul.f32 1.0, %v633
    %v635 = vtanh.pop %v615
    %v636 = vmul.f32 %v634, %v490
    %638 = vrot.lane.b32.xlu0 %v635, 64
    %v639 = vpop.permute.xlu0 %638
    %v641 = vmul.f32 %v634, %v639
    %643 = vrot.lane.b32.xlu0 %v641, 32
    %v644 = vpop.permute.xlu0 %643
    %v646 = vadd.f32 %v636, %v644
    %v647 = vtanh.pop %v646
    %649 = vrot.lane.b32.xlu0 %v647, 64
    %v650 = vpop.permute.xlu0 %649
    %v652 = vmul.f32 %v634, %v650
    %654 = vrot.lane.b32.xlu0 %v652, 32
    %v655 = vpop.permute.xlu0 %654
    %657 = vst.msk [vmem:[#allocation2 + $0x4] sm:$0xf] %vm501, %v655
    %v658 = vsel %vm338, %v655, 0
    %660 = vmatpush.msra.mxu0 0.0
    %661 = vmatpush.msra.mxu0 0.0
    %662 = vmatpush.msra.mxu0 0.0
    %663 = vmatpush.msra.mxu0 0.0
    %664 = vmatpush.msra.mxu0 0.0
    %665 = vmatpush.msra.mxu0 0.0
    %666 = vmatpush.msra.mxu0 0.0
    %667 = vmatpush.msra.mxu0 0.0
    %668 = vmatpush.msra.mxu0 0.0
    %669 = vmatpush.msra.mxu0 0.0
    %670 = vmatpush.msra.mxu0 0.0
    %671 = vmatpush.msra.mxu0 0.0
    %672 = vmatpush.msra.mxu0 %v330
    %673 = vmatpush.msra.mxu0 %v329
    %674 = vmatpush.msra.mxu0 %v328
    %675 = vmatpush.msra.mxu0 %v327
    %676 = vmatmul.f32.gmra.mxu0 %v658
    %v677 = vpop.f32.mrf.mxu0
    %v678 = vadd.f32 0.0, %v677
    %679 = vdwg.mxu0
    %680 = vmatpush.msra.mxu0 0.0
    %681 = vmatpush.msra.mxu0 0.0
    %682 = vmatpush.msra.mxu0 0.0
    %683 = vmatpush.msra.mxu0 0.0
    %684 = vmatpush.msra.mxu0 0.0
    %685 = vmatpush.msra.mxu0 0.0
    %686 = vmatpush.msra.mxu0 0.0
    %687 = vmatpush.msra.mxu0 0.0
    %688 = vmatpush.msra.mxu0 0.0
    %689 = vmatpush.msra.mxu0 0.0
    %690 = vmatpush.msra.mxu0 0.0
    %691 = vmatpush.msra.mxu0 0.0
    %692 = vmatpush.msra.mxu0 %v322
    %693 = vmatpush.msra.mxu0 %v321
    %694 = vmatpush.msra.mxu0 %v320
    %695 = vmatpush.msra.mxu0 %v319
    %696 = vmatmul.f32.gmra.mxu0 %v593
    %v697 = vpop.f32.mrf.mxu0
    %v698 = vadd.f32 0.0, %v697
    %699 = vdwg.mxu0
    %v700 = vadd.f32 %v316, %v698
    %v701 = vxor.u32 %v700, 2147483648
    %v702 = vmul.f32 %v701, 1.442695
    %v703 = vpow.pop %v702
    %v704 = vadd.f32 %v703, 1.0
    %v705 = vrcp.pop %v704
    %v706 = vmul.f32 %v704, %v705
    %v707 = vsub.f32 1.0, %v706
    %v708 = vmul.f32 %v705, %v707
    %v709 = vadd.f32 %v705, %v708
    %vm710 = vweird.f32 %v704
    %vm711 = vweird.f32 %v705
    %vm712 = vmor %vm710, %vm711
    %v713 = vsel %vm712, %v705, %v709
    %v714 = vand.u32 2147483647, %v704
    %vm715 = vcmp.eq.f32.partialorder %v714, 8.507059e+37
    %v716 = vand.u32 %v704, 2147483648
    %v717 = vor.u32 1.1754944e-38, %v716
    %v718 = vsel %vm715, %v717, %v713
    %v719 = vmul.f32 1.0, %v718
    %v720 = vtanh.pop %v700
    %v722 = vrot.slane %v582, 4
    %v724 = vmul.f32 %v719, %v722
    %726 = vrot.lane.b32.xlu0 %v720, 64
    %v727 = vpop.permute.xlu0 %726
    %v729 = vmul.f32 %v719, %v727
    %731 = vrot.lane.b32.xlu0 %v729, 32
    %v732 = vpop.permute.xlu0 %731
    %v734 = vadd.f32 %v724, %v732
    %v735 = vtanh.pop %v734
    %737 = vrot.lane.b32.xlu0 %v735, 64
    %v738 = vpop.permute.xlu0 %737
    %v740 = vmul.f32 %v719, %v738
    %742 = vrot.lane.b32.xlu0 %v740, 32
    %v743 = vpop.permute.xlu0 %742
    %v744 = vsel %vm338, %v743, 0
    %746 = vmatpush.msra.mxu0 0.0
    %747 = vmatpush.msra.mxu0 0.0
    %748 = vmatpush.msra.mxu0 0.0
    %749 = vmatpush.msra.mxu0 0.0
    %750 = vmatpush.msra.mxu0 0.0
    %751 = vmatpush.msra.mxu0 0.0
    %752 = vmatpush.msra.mxu0 0.0
    %753 = vmatpush.msra.mxu0 0.0
    %754 = vmatpush.msra.mxu0 0.0
    %755 = vmatpush.msra.mxu0 0.0
    %756 = vmatpush.msra.mxu0 0.0
    %757 = vmatpush.msra.mxu0 0.0
    %758 = vmatpush.msra.mxu0 %v326
    %759 = vmatpush.msra.mxu0 %v325
    %760 = vmatpush.msra.mxu0 %v324
    %761 = vmatpush.msra.mxu0 %v323
    %762 = vmatmul.f32.gmra.mxu0 %v744
    %v763 = vpop.f32.mrf.mxu0
    %v764 = vadd.f32 %v678, %v763
    %765 = vdwg.mxu0
    %v766 = vadd.f32 %v764, %v453
    %v767 = vxor.u32 %v766, 2147483648
    %v768 = vmul.f32 %v767, 1.442695
    %v769 = vpow.pop %v768
    %v770 = vadd.f32 %v769, 1.0
    %v771 = vrcp.pop %v770
    %v772 = vmul.f32 %v770, %v771
    %v773 = vsub.f32 1.0, %v772
    %v774 = vmul.f32 %v771, %v773
    %v775 = vadd.f32 %v771, %v774
    %vm776 = vweird.f32 %v770
    %vm777 = vweird.f32 %v771
    %vm778 = vmor %vm776, %vm777
    %v779 = vsel %vm778, %v771, %v775
    %v780 = vand.u32 2147483647, %v770
    %vm781 = vcmp.eq.f32.partialorder %v780, 8.507059e+37
    %v782 = vand.u32 %v770, 2147483648
    %v783 = vor.u32 1.1754944e-38, %v782
    %v784 = vsel %vm781, %v783, %v779
    %v785 = vmul.f32 1.0, %v784
    %v786 = vtanh.pop %v766
    %v787 = vmul.f32 %v785, %v646
    %789 = vrot.lane.b32.xlu0 %v786, 64
    %v790 = vpop.permute.xlu0 %789
    %v792 = vmul.f32 %v785, %v790
    %794 = vrot.lane.b32.xlu0 %v792, 32
    %v795 = vpop.permute.xlu0 %794
    %v797 = vadd.f32 %v787, %v795
    %v798 = vtanh.pop %v797
    %800 = vrot.lane.b32.xlu0 %v798, 64
    %v801 = vpop.permute.xlu0 %800
    %v803 = vmul.f32 %v785, %v801
    %805 = vrot.lane.b32.xlu0 %v803, 32
    %v806 = vpop.permute.xlu0 %805
    %808 = vst.msk [vmem:[#allocation2 + $0x8] sm:$0xf] %vm501, %v806
    %v809 = vsel %vm338, %v806, 0
    %811 = vmatpush.msra.mxu0 0.0
    %812 = vmatpush.msra.mxu0 0.0
    %813 = vmatpush.msra.mxu0 0.0
    %814 = vmatpush.msra.mxu0 0.0
    %815 = vmatpush.msra.mxu0 0.0
    %816 = vmatpush.msra.mxu0 0.0
    %817 = vmatpush.msra.mxu0 0.0
    %818 = vmatpush.msra.mxu0 0.0
    %819 = vmatpush.msra.mxu0 0.0
    %820 = vmatpush.msra.mxu0 0.0
    %821 = vmatpush.msra.mxu0 0.0
    %822 = vmatpush.msra.mxu0 0.0
    %823 = vmatpush.msra.mxu0 %v330
    %824 = vmatpush.msra.mxu0 %v329
    %825 = vmatpush.msra.mxu0 %v328
    %826 = vmatpush.msra.mxu0 %v327
    %827 = vmatmul.f32.gmra.mxu0 %v809
    %v828 = vpop.f32.mrf.mxu0
    %v829 = vadd.f32 0.0, %v828
    %830 = vdwg.mxu0
    %831 = vmatpush.msra.mxu0 0.0
    %832 = vmatpush.msra.mxu0 0.0
    %833 = vmatpush.msra.mxu0 0.0
    %834 = vmatpush.msra.mxu0 0.0
    %835 = vmatpush.msra.mxu0 0.0
    %836 = vmatpush.msra.mxu0 0.0
    %837 = vmatpush.msra.mxu0 0.0
    %838 = vmatpush.msra.mxu0 0.0
    %839 = vmatpush.msra.mxu0 0.0
    %840 = vmatpush.msra.mxu0 0.0
    %841 = vmatpush.msra.mxu0 0.0
    %842 = vmatpush.msra.mxu0 0.0
    %843 = vmatpush.msra.mxu0 %v322
    %844 = vmatpush.msra.mxu0 %v321
    %845 = vmatpush.msra.mxu0 %v320
    %846 = vmatpush.msra.mxu0 %v319
    %847 = vmatmul.f32.gmra.mxu0 %v744
    %v848 = vpop.f32.mrf.mxu0
    %v849 = vadd.f32 0.0, %v848
    %850 = vdwg.mxu0
    %v852 = vrot.slane %v849, 4
    %v854 = vadd.f32 %v316, %v852
    %v855 = vxor.u32 %v854, 2147483648
    %v856 = vmul.f32 %v855, 1.442695
    %v857 = vpow.pop %v856
    %v858 = vadd.f32 %v857, 1.0
    %v859 = vrcp.pop %v858
    %v860 = vmul.f32 %v858, %v859
    %v861 = vsub.f32 1.0, %v860
    %v862 = vmul.f32 %v859, %v861
    %v863 = vadd.f32 %v859, %v862
    %vm864 = vweird.f32 %v858
    %vm865 = vweird.f32 %v859
    %vm866 = vmor %vm864, %vm865
    %v867 = vsel %vm866, %v859, %v863
    %v868 = vand.u32 2147483647, %v858
    %vm869 = vcmp.eq.f32.partialorder %v868, 8.507059e+37
    %v870 = vand.u32 %v858, 2147483648
    %v871 = vor.u32 1.1754944e-38, %v870
    %v872 = vsel %vm869, %v871, %v867
    %v873 = vmul.f32 1.0, %v872
    %v874 = vtanh.pop %v854
    %v876 = vrot.slane %v734, 4
    %v878 = vmul.f32 %v873, %v876
    %880 = vrot.lane.b32.xlu0 %v874, 64
    %v881 = vpop.permute.xlu0 %880
    %v883 = vmul.f32 %v873, %v881
    %885 = vrot.lane.b32.xlu0 %v883, 32
    %v886 = vpop.permute.xlu0 %885
    %v888 = vadd.f32 %v878, %v886
    %v889 = vtanh.pop %v888
    %891 = vrot.lane.b32.xlu0 %v889, 64
    %v892 = vpop.permute.xlu0 %891
    %v894 = vmul.f32 %v873, %v892
    %v896 = vrot.slane %v894, 4
    %897 = vrot.lane.b32.xlu0 %v896, 32
    %v898 = vpop.permute.xlu0 %897
    %v899 = vsel %vm338, %v898, 0
    %901 = vmatpush.msra.mxu0 0.0
    %902 = vmatpush.msra.mxu0 0.0
    %903 = vmatpush.msra.mxu0 0.0
    %904 = vmatpush.msra.mxu0 0.0
    %905 = vmatpush.msra.mxu0 0.0
    %906 = vmatpush.msra.mxu0 0.0
    %907 = vmatpush.msra.mxu0 0.0
    %908 = vmatpush.msra.mxu0 0.0
    %909 = vmatpush.msra.mxu0 0.0
    %910 = vmatpush.msra.mxu0 0.0
    %911 = vmatpush.msra.mxu0 0.0
    %912 = vmatpush.msra.mxu0 0.0
    %913 = vmatpush.msra.mxu0 %v326
    %914 = vmatpush.msra.mxu0 %v325
    %915 = vmatpush.msra.mxu0 %v324
    %916 = vmatpush.msra.mxu0 %v323
    %917 = vmatmul.f32.gmra.mxu0 %v899
    %v918 = vpop.f32.mrf.mxu0
    %v919 = vadd.f32 %v829, %v918
    %920 = vdwg.mxu0
    %v921 = vadd.f32 %v919, %v453
    %v922 = vxor.u32 %v921, 2147483648
    %v923 = vmul.f32 %v922, 1.442695
    %v924 = vpow.pop %v923
    %v925 = vadd.f32 %v924, 1.0
    %v926 = vrcp.pop %v925
    %v927 = vmul.f32 %v925, %v926
    %v928 = vsub.f32 1.0, %v927
    %v929 = vmul.f32 %v926, %v928
    %v930 = vadd.f32 %v926, %v929
    %vm931 = vweird.f32 %v925
    %vm932 = vweird.f32 %v926
    %vm933 = vmor %vm931, %vm932
    %v934 = vsel %vm933, %v926, %v930
    %v935 = vand.u32 2147483647, %v925
    %vm936 = vcmp.eq.f32.partialorder %v935, 8.507059e+37
    %v937 = vand.u32 %v925, 2147483648
    %v938 = vor.u32 1.1754944e-38, %v937
    %v939 = vsel %vm936, %v938, %v934
    %v940 = vmul.f32 1.0, %v939
    %v941 = vtanh.pop %v921
    %v942 = vmul.f32 %v940, %v797
    %944 = vrot.lane.b32.xlu0 %v941, 64
    %v945 = vpop.permute.xlu0 %944
    %v947 = vmul.f32 %v940, %v945
    %949 = vrot.lane.b32.xlu0 %v947, 32
    %v950 = vpop.permute.xlu0 %949
    %v952 = vadd.f32 %v942, %v950
    %v953 = vtanh.pop %v952
    %955 = vrot.lane.b32.xlu0 %v953, 64
    %v956 = vpop.permute.xlu0 %955
    %v958 = vmul.f32 %v940, %v956
    %960 = vrot.lane.b32.xlu0 %v958, 32
    %v961 = vpop.permute.xlu0 %960
    %963 = vst.msk [vmem:[#allocation2 + $0xc] sm:$0xf] %vm501, %v961
    %v964 = vsel %vm338, %v961, 0
    %966 = vmatpush.msra.mxu0 0.0
    %967 = vmatpush.msra.mxu0 0.0
    %968 = vmatpush.msra.mxu0 0.0
    %969 = vmatpush.msra.mxu0 0.0
    %970 = vmatpush.msra.mxu0 0.0
    %971 = vmatpush.msra.mxu0 0.0
    %972 = vmatpush.msra.mxu0 0.0
    %973 = vmatpush.msra.mxu0 0.0
    %974 = vmatpush.msra.mxu0 0.0
    %975 = vmatpush.msra.mxu0 0.0
    %976 = vmatpush.msra.mxu0 0.0
    %977 = vmatpush.msra.mxu0 0.0
    %978 = vmatpush.msra.mxu0 %v330
    %979 = vmatpush.msra.mxu0 %v329
    %980 = vmatpush.msra.mxu0 %v328
    %981 = vmatpush.msra.mxu0 %v327
    %982 = vmatmul.f32.gmra.mxu0 %v964
    %v983 = vpop.f32.mrf.mxu0
    %v984 = vadd.f32 0.0, %v983
    %985 = vdwg.mxu0
    %986 = vmatpush.msra.mxu0 0.0
    %987 = vmatpush.msra.mxu0 0.0
    %988 = vmatpush.msra.mxu0 0.0
    %989 = vmatpush.msra.mxu0 0.0
    %990 = vmatpush.msra.mxu0 0.0
    %991 = vmatpush.msra.mxu0 0.0
    %992 = vmatpush.msra.mxu0 0.0
    %993 = vmatpush.msra.mxu0 0.0
    %994 = vmatpush.msra.mxu0 0.0
    %995 = vmatpush.msra.mxu0 0.0
    %996 = vmatpush.msra.mxu0 0.0
    %997 = vmatpush.msra.mxu0 0.0
    %998 = vmatpush.msra.mxu0 %v322
    %999 = vmatpush.msra.mxu0 %v321
    %1000 = vmatpush.msra.mxu0 %v320
    %1001 = vmatpush.msra.mxu0 %v319
    %1002 = vmatmul.f32.gmra.mxu0 %v899
    %v1003 = vpop.f32.mrf.mxu0
    %v1004 = vadd.f32 0.0, %v1003
    %1005 = vdwg.mxu0
    %v1006 = vadd.f32 %v317, %v1004
    %v1007 = vxor.u32 %v1006, 2147483648
    %v1008 = vmul.f32 %v1007, 1.442695
    %v1009 = vpow.pop %v1008
    %v1010 = vadd.f32 %v1009, 1.0
    %v1011 = vrcp.pop %v1010
    %v1012 = vmul.f32 %v1010, %v1011
    %v1013 = vsub.f32 1.0, %v1012
    %v1014 = vmul.f32 %v1011, %v1013
    %v1015 = vadd.f32 %v1011, %v1014
    %vm1016 = vweird.f32 %v1010
    %vm1017 = vweird.f32 %v1011
    %vm1018 = vmor %vm1016, %vm1017
    %v1019 = vsel %vm1018, %v1011, %v1015
    %v1020 = vand.u32 2147483647, %v1010
    %vm1021 = vcmp.eq.f32.partialorder %v1020, 8.507059e+37
    %v1022 = vand.u32 %v1010, 2147483648
    %v1023 = vor.u32 1.1754944e-38, %v1022
    %v1024 = vsel %vm1021, %v1023, %v1019
    %v1025 = vmul.f32 1.0, %v1024
    %v1026 = vtanh.pop %v1006
    %v1028 = vrot.slane %v888, 4
    %v1030 = vmul.f32 %v1025, %v1028
    %1032 = vrot.lane.b32.xlu0 %v1026, 64
    %v1033 = vpop.permute.xlu0 %1032
    %v1035 = vmul.f32 %v1025, %v1033
    %1037 = vrot.lane.b32.xlu0 %v1035, 32
    %v1038 = vpop.permute.xlu0 %1037
    %v1040 = vadd.f32 %v1030, %v1038
    %v1041 = vtanh.pop %v1040
    %1043 = vrot.lane.b32.xlu0 %v1041, 64
    %v1044 = vpop.permute.xlu0 %1043
    %v1046 = vmul.f32 %v1025, %v1044
    %1048 = vrot.lane.b32.xlu0 %v1046, 32
    %v1049 = vpop.permute.xlu0 %1048
    %v1050 = vsel %vm338, %v1049, 0
    %1052 = vmatpush.msra.mxu0 0.0
    %1053 = vmatpush.msra.mxu0 0.0
    %1054 = vmatpush.msra.mxu0 0.0
    %1055 = vmatpush.msra.mxu0 0.0
    %1056 = vmatpush.msra.mxu0 0.0
    %1057 = vmatpush.msra.mxu0 0.0
    %1058 = vmatpush.msra.mxu0 0.0
    %1059 = vmatpush.msra.mxu0 0.0
    %1060 = vmatpush.msra.mxu0 0.0
    %1061 = vmatpush.msra.mxu0 0.0
    %1062 = vmatpush.msra.mxu0 0.0
    %1063 = vmatpush.msra.mxu0 0.0
    %1064 = vmatpush.msra.mxu0 %v326
    %1065 = vmatpush.msra.mxu0 %v325
    %1066 = vmatpush.msra.mxu0 %v324
    %1067 = vmatpush.msra.mxu0 %v323
    %1068 = vmatmul.f32.gmra.mxu0 %v1050
    %v1069 = vpop.f32.mrf.mxu0
    %v1070 = vadd.f32 %v984, %v1069
    %1071 = vdwg.mxu0
    %v1072 = vadd.f32 %v1070, %v453
    %v1073 = vxor.u32 %v1072, 2147483648
    %v1074 = vmul.f32 %v1073, 1.442695
    %v1075 = vpow.pop %v1074
    %v1076 = vadd.f32 %v1075, 1.0
    %v1077 = vrcp.pop %v1076
    %v1078 = vmul.f32 %v1076, %v1077
    %v1079 = vsub.f32 1.0, %v1078
    %v1080 = vmul.f32 %v1077, %v1079
    %v1081 = vadd.f32 %v1077, %v1080
    %vm1082 = vweird.f32 %v1076
    %vm1083 = vweird.f32 %v1077
    %vm1084 = vmor %vm1082, %vm1083
    %v1085 = vsel %vm1084, %v1077, %v1081
    %v1086 = vand.u32 2147483647, %v1076
    %vm1087 = vcmp.eq.f32.partialorder %v1086, 8.507059e+37
    %v1088 = vand.u32 %v1076, 2147483648
    %v1089 = vor.u32 1.1754944e-38, %v1088
    %v1090 = vsel %vm1087, %v1089, %v1085
    %v1091 = vmul.f32 1.0, %v1090
    %v1092 = vtanh.pop %v1072
    %v1093 = vmul.f32 %v1091, %v952
    %1095 = vrot.lane.b32.xlu0 %v1092, 64
    %v1096 = vpop.permute.xlu0 %1095
    %v1098 = vmul.f32 %v1091, %v1096
    %1100 = vrot.lane.b32.xlu0 %v1098, 32
    %v1101 = vpop.permute.xlu0 %1100
    %v1103 = vadd.f32 %v1093, %v1101
    %v1104 = vtanh.pop %v1103
    %1106 = vrot.lane.b32.xlu0 %v1104, 64
    %v1107 = vpop.permute.xlu0 %1106
    %v1109 = vmul.f32 %v1091, %v1107
    %1111 = vrot.lane.b32.xlu0 %v1109, 32
    %v1112 = vpop.permute.xlu0 %1111
    %1114 = vst.msk [vmem:[#allocation2 + $0x10] sm:$0xf] %vm501, %v1112
    %v1115 = vsel %vm338, %v1112, 0
    %1117 = vmatpush.msra.mxu0 0.0
    %1118 = vmatpush.msra.mxu0 0.0
    %1119 = vmatpush.msra.mxu0 0.0
    %1120 = vmatpush.msra.mxu0 0.0
    %1121 = vmatpush.msra.mxu0 0.0
    %1122 = vmatpush.msra.mxu0 0.0
    %1123 = vmatpush.msra.mxu0 0.0
    %1124 = vmatpush.msra.mxu0 0.0
    %1125 = vmatpush.msra.mxu0 0.0
    %1126 = vmatpush.msra.mxu0 0.0
    %1127 = vmatpush.msra.mxu0 0.0
    %1128 = vmatpush.msra.mxu0 0.0
    %1129 = vmatpush.msra.mxu0 %v330
    %1130 = vmatpush.msra.mxu0 %v329
    %1131 = vmatpush.msra.mxu0 %v328
    %1132 = vmatpush.msra.mxu0 %v327
    %1133 = vmatmul.f32.gmra.mxu0 %v1115
    %v1134 = vpop.f32.mrf.mxu0
    %v1135 = vadd.f32 0.0, %v1134
    %1136 = vdwg.mxu0
    %1137 = vmatpush.msra.mxu0 0.0
    %1138 = vmatpush.msra.mxu0 0.0
    %1139 = vmatpush.msra.mxu0 0.0
    %1140 = vmatpush.msra.mxu0 0.0
    %1141 = vmatpush.msra.mxu0 0.0
    %1142 = vmatpush.msra.mxu0 0.0
    %1143 = vmatpush.msra.mxu0 0.0
    %1144 = vmatpush.msra.mxu0 0.0
    %1145 = vmatpush.msra.mxu0 0.0
    %1146 = vmatpush.msra.mxu0 0.0
    %1147 = vmatpush.msra.mxu0 0.0
    %1148 = vmatpush.msra.mxu0 0.0
    %1149 = vmatpush.msra.mxu0 %v322
    %1150 = vmatpush.msra.mxu0 %v321
    %1151 = vmatpush.msra.mxu0 %v320
    %1152 = vmatpush.msra.mxu0 %v319
    %1153 = vmatmul.f32.gmra.mxu0 %v1050
    %v1154 = vpop.f32.mrf.mxu0
    %v1155 = vadd.f32 0.0, %v1154
    %1156 = vdwg.mxu0
    %v1158 = vrot.slane %v1155, 4
    %v1160 = vadd.f32 %v317, %v1158
    %v1161 = vxor.u32 %v1160, 2147483648
    %v1162 = vmul.f32 %v1161, 1.442695
    %v1163 = vpow.pop %v1162
    %v1164 = vadd.f32 %v1163, 1.0
    %v1165 = vrcp.pop %v1164
    %v1166 = vmul.f32 %v1164, %v1165
    %v1167 = vsub.f32 1.0, %v1166
    %v1168 = vmul.f32 %v1165, %v1167
    %v1169 = vadd.f32 %v1165, %v1168
    %vm1170 = vweird.f32 %v1164
    %vm1171 = vweird.f32 %v1165
    %vm1172 = vmor %vm1170, %vm1171
    %v1173 = vsel %vm1172, %v1165, %v1169
    %v1174 = vand.u32 2147483647, %v1164
    %vm1175 = vcmp.eq.f32.partialorder %v1174, 8.507059e+37
    %v1176 = vand.u32 %v1164, 2147483648
    %v1177 = vor.u32 1.1754944e-38, %v1176
    %v1178 = vsel %vm1175, %v1177, %v1173
    %v1179 = vmul.f32 1.0, %v1178
    %v1180 = vtanh.pop %v1160
    %v1182 = vrot.slane %v1040, 4
    %v1184 = vmul.f32 %v1179, %v1182
    %1186 = vrot.lane.b32.xlu0 %v1180, 64
    %v1187 = vpop.permute.xlu0 %1186
    %v1189 = vmul.f32 %v1179, %v1187
    %1191 = vrot.lane.b32.xlu0 %v1189, 32
    %v1192 = vpop.permute.xlu0 %1191
    %v1194 = vadd.f32 %v1184, %v1192
    %v1195 = vtanh.pop %v1194
    %1197 = vrot.lane.b32.xlu0 %v1195, 64
    %v1198 = vpop.permute.xlu0 %1197
    %v1200 = vmul.f32 %v1179, %v1198
    %v1202 = vrot.slane %v1200, 4
    %1203 = vrot.lane.b32.xlu0 %v1202, 32
    %v1204 = vpop.permute.xlu0 %1203
    %v1205 = vsel %vm338, %v1204, 0
    %1207 = vmatpush.msra.mxu0 0.0
    %1208 = vmatpush.msra.mxu0 0.0
    %1209 = vmatpush.msra.mxu0 0.0
    %1210 = vmatpush.msra.mxu0 0.0
    %1211 = vmatpush.msra.mxu0 0.0
    %1212 = vmatpush.msra.mxu0 0.0
    %1213 = vmatpush.msra.mxu0 0.0
    %1214 = vmatpush.msra.mxu0 0.0
    %1215 = vmatpush.msra.mxu0 0.0
    %1216 = vmatpush.msra.mxu0 0.0
    %1217 = vmatpush.msra.mxu0 0.0
    %1218 = vmatpush.msra.mxu0 0.0
    %1219 = vmatpush.msra.mxu0 %v326
    %1220 = vmatpush.msra.mxu0 %v325
    %1221 = vmatpush.msra.mxu0 %v324
    %1222 = vmatpush.msra.mxu0 %v323
    %1223 = vmatmul.f32.gmra.mxu0 %v1205
    %v1224 = vpop.f32.mrf.mxu0
    %v1225 = vadd.f32 %v1135, %v1224
    %1226 = vdwg.mxu0
    %v1227 = vadd.f32 %v1225, %v453
    %v1228 = vxor.u32 %v1227, 2147483648
    %v1229 = vmul.f32 %v1228, 1.442695
    %v1230 = vpow.pop %v1229
    %v1231 = vadd.f32 %v1230, 1.0
    %v1232 = vrcp.pop %v1231
    %v1233 = vmul.f32 %v1231, %v1232
    %v1234 = vsub.f32 1.0, %v1233
    %v1235 = vmul.f32 %v1232, %v1234
    %v1236 = vadd.f32 %v1232, %v1235
    %vm1237 = vweird.f32 %v1231
    %vm1238 = vweird.f32 %v1232
    %vm1239 = vmor %vm1237, %vm1238
    %v1240 = vsel %vm1239, %v1232, %v1236
    %v1241 = vand.u32 2147483647, %v1231
    %vm1242 = vcmp.eq.f32.partialorder %v1241, 8.507059e+37
    %v1243 = vand.u32 %v1231, 2147483648
    %v1244 = vor.u32 1.1754944e-38, %v1243
    %v1245 = vsel %vm1242, %v1244, %v1240
    %v1246 = vmul.f32 1.0, %v1245
    %v1247 = vtanh.pop %v1227
    %v1248 = vmul.f32 %v1246, %v1103
    %1250 = vrot.lane.b32.xlu0 %v1247, 64
    %v1251 = vpop.permute.xlu0 %1250
    %v1253 = vmul.f32 %v1246, %v1251
    %1255 = vrot.lane.b32.xlu0 %v1253, 32
    %v1256 = vpop.permute.xlu0 %1255
    %v1258 = vadd.f32 %v1248, %v1256
    %v1259 = vtanh.pop %v1258
    %1261 = vrot.lane.b32.xlu0 %v1259, 64
    %v1262 = vpop.permute.xlu0 %1261
    %v1264 = vmul.f32 %v1246, %v1262
    %1266 = vrot.lane.b32.xlu0 %v1264, 32
    %v1267 = vpop.permute.xlu0 %1266
    %1269 = vst.msk [vmem:[#allocation2 + $0x14] sm:$0xf] %vm501, %v1267
    %v1270 = vsel %vm338, %v1267, 0
    %1272 = vmatpush.msra.mxu0 0.0
    %1273 = vmatpush.msra.mxu0 0.0
    %1274 = vmatpush.msra.mxu0 0.0
    %1275 = vmatpush.msra.mxu0 0.0
    %1276 = vmatpush.msra.mxu0 0.0
    %1277 = vmatpush.msra.mxu0 0.0
    %1278 = vmatpush.msra.mxu0 0.0
    %1279 = vmatpush.msra.mxu0 0.0
    %1280 = vmatpush.msra.mxu0 0.0
    %1281 = vmatpush.msra.mxu0 0.0
    %1282 = vmatpush.msra.mxu0 0.0
    %1283 = vmatpush.msra.mxu0 0.0
    %1284 = vmatpush.msra.mxu0 %v330
    %1285 = vmatpush.msra.mxu0 %v329
    %1286 = vmatpush.msra.mxu0 %v328
    %1287 = vmatpush.msra.mxu0 %v327
    %1288 = vmatmul.f32.gmra.mxu0 %v1270
    %v1289 = vpop.f32.mrf.mxu0
    %v1290 = vadd.f32 0.0, %v1289
    %1291 = vdwg.mxu0
    %1292 = vmatpush.msra.mxu0 0.0
    %1293 = vmatpush.msra.mxu0 0.0
    %1294 = vmatpush.msra.mxu0 0.0
    %1295 = vmatpush.msra.mxu0 0.0
    %1296 = vmatpush.msra.mxu0 0.0
    %1297 = vmatpush.msra.mxu0 0.0
    %1298 = vmatpush.msra.mxu0 0.0
    %1299 = vmatpush.msra.mxu0 0.0
    %1300 = vmatpush.msra.mxu0 0.0
    %1301 = vmatpush.msra.mxu0 0.0
    %1302 = vmatpush.msra.mxu0 0.0
    %1303 = vmatpush.msra.mxu0 0.0
    %1304 = vmatpush.msra.mxu0 %v322
    %1305 = vmatpush.msra.mxu0 %v321
    %1306 = vmatpush.msra.mxu0 %v320
    %1307 = vmatpush.msra.mxu0 %v319
    %1308 = vmatmul.f32.gmra.mxu0 %v1205
    %v1309 = vpop.f32.mrf.mxu0
    %v1310 = vadd.f32 0.0, %v1309
    %1311 = vdwg.mxu0
    %v1312 = vadd.f32 %v318, %v1310
    %v1313 = vxor.u32 %v1312, 2147483648
    %v1314 = vmul.f32 %v1313, 1.442695
    %v1315 = vpow.pop %v1314
    %v1316 = vadd.f32 %v1315, 1.0
    %v1317 = vrcp.pop %v1316
    %v1318 = vmul.f32 %v1316, %v1317
    %v1319 = vsub.f32 1.0, %v1318
    %v1320 = vmul.f32 %v1317, %v1319
    %v1321 = vadd.f32 %v1317, %v1320
    %vm1322 = vweird.f32 %v1316
    %vm1323 = vweird.f32 %v1317
    %vm1324 = vmor %vm1322, %vm1323
    %v1325 = vsel %vm1324, %v1317, %v1321
    %v1326 = vand.u32 2147483647, %v1316
    %vm1327 = vcmp.eq.f32.partialorder %v1326, 8.507059e+37
    %v1328 = vand.u32 %v1316, 2147483648
    %v1329 = vor.u32 1.1754944e-38, %v1328
    %v1330 = vsel %vm1327, %v1329, %v1325
    %v1331 = vmul.f32 1.0, %v1330
    %v1332 = vtanh.pop %v1312
    %v1334 = vrot.slane %v1194, 4
    %v1336 = vmul.f32 %v1331, %v1334
    %1338 = vrot.lane.b32.xlu0 %v1332, 64
    %v1339 = vpop.permute.xlu0 %1338
    %v1341 = vmul.f32 %v1331, %v1339
    %1343 = vrot.lane.b32.xlu0 %v1341, 32
    %v1344 = vpop.permute.xlu0 %1343
    %v1346 = vadd.f32 %v1336, %v1344
    %v1347 = vtanh.pop %v1346
    %1349 = vrot.lane.b32.xlu0 %v1347, 64
    %v1350 = vpop.permute.xlu0 %1349
    %v1352 = vmul.f32 %v1331, %v1350
    %1354 = vrot.lane.b32.xlu0 %v1352, 32
    %v1355 = vpop.permute.xlu0 %1354
    %v1356 = vsel %vm338, %v1355, 0
    %1358 = vmatpush.msra.mxu0 0.0
    %1359 = vmatpush.msra.mxu0 0.0
    %1360 = vmatpush.msra.mxu0 0.0
    %1361 = vmatpush.msra.mxu0 0.0
    %1362 = vmatpush.msra.mxu0 0.0
    %1363 = vmatpush.msra.mxu0 0.0
    %1364 = vmatpush.msra.mxu0 0.0
    %1365 = vmatpush.msra.mxu0 0.0
    %1366 = vmatpush.msra.mxu0 0.0
    %1367 = vmatpush.msra.mxu0 0.0
    %1368 = vmatpush.msra.mxu0 0.0
    %1369 = vmatpush.msra.mxu0 0.0
    %1370 = vmatpush.msra.mxu0 %v326
    %1371 = vmatpush.msra.mxu0 %v325
    %1372 = vmatpush.msra.mxu0 %v324
    %1373 = vmatpush.msra.mxu0 %v323
    %1374 = vmatmul.f32.gmra.mxu0 %v1356
    %v1375 = vpop.f32.mrf.mxu0
    %v1376 = vadd.f32 %v1290, %v1375
    %1377 = vdwg.mxu0
    %v1378 = vadd.f32 %v1376, %v453
    %v1379 = vxor.u32 %v1378, 2147483648
    %v1380 = vmul.f32 %v1379, 1.442695
    %v1381 = vpow.pop %v1380
    %v1382 = vadd.f32 %v1381, 1.0
    %v1383 = vrcp.pop %v1382
    %v1384 = vmul.f32 %v1382, %v1383
    %v1385 = vsub.f32 1.0, %v1384
    %v1386 = vmul.f32 %v1383, %v1385
    %v1387 = vadd.f32 %v1383, %v1386
    %vm1388 = vweird.f32 %v1382
    %vm1389 = vweird.f32 %v1383
    %vm1390 = vmor %vm1388, %vm1389
    %v1391 = vsel %vm1390, %v1383, %v1387
    %v1392 = vand.u32 2147483647, %v1382
    %vm1393 = vcmp.eq.f32.partialorder %v1392, 8.507059e+37
    %v1394 = vand.u32 %v1382, 2147483648
    %v1395 = vor.u32 1.1754944e-38, %v1394
    %v1396 = vsel %vm1393, %v1395, %v1391
    %v1397 = vmul.f32 1.0, %v1396
    %v1398 = vtanh.pop %v1378
    %v1399 = vmul.f32 %v1397, %v1258
    %1401 = vrot.lane.b32.xlu0 %v1398, 64
    %v1402 = vpop.permute.xlu0 %1401
    %v1404 = vmul.f32 %v1397, %v1402
    %1406 = vrot.lane.b32.xlu0 %v1404, 32
    %v1407 = vpop.permute.xlu0 %1406
    %v1409 = vadd.f32 %v1399, %v1407
    %v1410 = vtanh.pop %v1409
    %1412 = vrot.lane.b32.xlu0 %v1410, 64
    %v1413 = vpop.permute.xlu0 %1412
    %v1415 = vmul.f32 %v1397, %v1413
    %1417 = vrot.lane.b32.xlu0 %v1415, 32
    %v1418 = vpop.permute.xlu0 %1417
    %1420 = vst.msk [vmem:[#allocation2 + $0x18] sm:$0xf] %vm501, %v1418
    %v1421 = vsel %vm338, %v1418, 0
    %1423 = vmatpush.msra.mxu0 0.0
    %1424 = vmatpush.msra.mxu0 0.0
    %1425 = vmatpush.msra.mxu0 0.0
    %1426 = vmatpush.msra.mxu0 0.0
    %1427 = vmatpush.msra.mxu0 0.0
    %1428 = vmatpush.msra.mxu0 0.0
    %1429 = vmatpush.msra.mxu0 0.0
    %1430 = vmatpush.msra.mxu0 0.0
    %1431 = vmatpush.msra.mxu0 0.0
    %1432 = vmatpush.msra.mxu0 0.0
    %1433 = vmatpush.msra.mxu0 0.0
    %1434 = vmatpush.msra.mxu0 0.0
    %1435 = vmatpush.msra.mxu0 %v330
    %1436 = vmatpush.msra.mxu0 %v329
    %1437 = vmatpush.msra.mxu0 %v328
    %1438 = vmatpush.msra.mxu0 %v327
    %1439 = vmatmul.f32.gmra.mxu0 %v1421
    %v1440 = vpop.f32.mrf.mxu0
    %v1441 = vadd.f32 0.0, %v1440
    %1442 = vdwg.mxu0
    %1443 = vmatpush.msra.mxu0 0.0
    %1444 = vmatpush.msra.mxu0 0.0
    %1445 = vmatpush.msra.mxu0 0.0
    %1446 = vmatpush.msra.mxu0 0.0
    %1447 = vmatpush.msra.mxu0 0.0
    %1448 = vmatpush.msra.mxu0 0.0
    %1449 = vmatpush.msra.mxu0 0.0
    %1450 = vmatpush.msra.mxu0 0.0
    %1451 = vmatpush.msra.mxu0 0.0
    %1452 = vmatpush.msra.mxu0 0.0
    %1453 = vmatpush.msra.mxu0 0.0
    %1454 = vmatpush.msra.mxu0 0.0
    %1455 = vmatpush.msra.mxu0 %v322
    %1456 = vmatpush.msra.mxu0 %v321
    %1457 = vmatpush.msra.mxu0 %v320
    %1458 = vmatpush.msra.mxu0 %v319
    %1459 = vmatmul.f32.gmra.mxu0 %v1356
    %v1460 = vpop.f32.mrf.mxu0
    %v1461 = vadd.f32 0.0, %v1460
    %1462 = vdwg.mxu0
    %v1464 = vrot.slane %v1461, 4
    %v1466 = vadd.f32 %v318, %v1464
    %v1467 = vxor.u32 %v1466, 2147483648
    %v1468 = vmul.f32 %v1467, 1.442695
    %v1469 = vpow.pop %v1468
    %v1470 = vadd.f32 %v1469, 1.0
    %v1471 = vrcp.pop %v1470
    %v1472 = vmul.f32 %v1470, %v1471
    %v1473 = vsub.f32 1.0, %v1472
    %v1474 = vmul.f32 %v1471, %v1473
    %v1475 = vadd.f32 %v1471, %v1474
    %vm1476 = vweird.f32 %v1470
    %vm1477 = vweird.f32 %v1471
    %vm1478 = vmor %vm1476, %vm1477
    %v1479 = vsel %vm1478, %v1471, %v1475
    %v1480 = vand.u32 2147483647, %v1470
    %vm1481 = vcmp.eq.f32.partialorder %v1480, 8.507059e+37
    %v1482 = vand.u32 %v1470, 2147483648
    %v1483 = vor.u32 1.1754944e-38, %v1482
    %v1484 = vsel %vm1481, %v1483, %v1479
    %v1485 = vmul.f32 1.0, %v1484
    %v1486 = vtanh.pop %v1466
    %v1488 = vrot.slane %v1346, 4
    %v1490 = vmul.f32 %v1485, %v1488
    %1492 = vrot.lane.b32.xlu0 %v1486, 64
    %v1493 = vpop.permute.xlu0 %1492
    %v1495 = vmul.f32 %v1485, %v1493
    %1497 = vrot.lane.b32.xlu0 %v1495, 32
    %v1498 = vpop.permute.xlu0 %1497
    %v1500 = vadd.f32 %v1490, %v1498
    %v1501 = vtanh.pop %v1500
    %1503 = vrot.lane.b32.xlu0 %v1501, 64
    %v1504 = vpop.permute.xlu0 %1503
    %v1506 = vmul.f32 %v1485, %v1504
    %v1508 = vrot.slane %v1506, 4
    %1509 = vrot.lane.b32.xlu0 %v1508, 32
    %v1510 = vpop.permute.xlu0 %1509
    %v1511 = vsel %vm338, %v1510, 0
    %1513 = vmatpush.msra.mxu0 0.0
    %1514 = vmatpush.msra.mxu0 0.0
    %1515 = vmatpush.msra.mxu0 0.0
    %1516 = vmatpush.msra.mxu0 0.0
    %1517 = vmatpush.msra.mxu0 0.0
    %1518 = vmatpush.msra.mxu0 0.0
    %1519 = vmatpush.msra.mxu0 0.0
    %1520 = vmatpush.msra.mxu0 0.0
    %1521 = vmatpush.msra.mxu0 0.0
    %1522 = vmatpush.msra.mxu0 0.0
    %1523 = vmatpush.msra.mxu0 0.0
    %1524 = vmatpush.msra.mxu0 0.0
    %1525 = vmatpush.msra.mxu0 %v326
    %1526 = vmatpush.msra.mxu0 %v325
    %1527 = vmatpush.msra.mxu0 %v324
    %1528 = vmatpush.msra.mxu0 %v323
    %1529 = vmatmul.f32.gmra.mxu0 %v1511
    %v1530 = vpop.f32.mrf.mxu0
    %v1531 = vadd.f32 %v1441, %v1530
    %1532 = vdwg.mxu0
    %v1533 = vadd.f32 %v1531, %v453
    %v1534 = vxor.u32 %v1533, 2147483648
    %v1535 = vmul.f32 %v1534, 1.442695
    %v1536 = vpow.pop %v1535
    %v1537 = vadd.f32 %v1536, 1.0
    %v1538 = vrcp.pop %v1537
    %v1539 = vmul.f32 %v1537, %v1538
    %v1540 = vsub.f32 1.0, %v1539
    %v1541 = vmul.f32 %v1538, %v1540
    %v1542 = vadd.f32 %v1538, %v1541
    %vm1543 = vweird.f32 %v1537
    %vm1544 = vweird.f32 %v1538
    %vm1545 = vmor %vm1543, %vm1544
    %v1546 = vsel %vm1545, %v1538, %v1542
    %v1547 = vand.u32 2147483647, %v1537
    %vm1548 = vcmp.eq.f32.partialorder %v1547, 8.507059e+37
    %v1549 = vand.u32 %v1537, 2147483648
    %v1550 = vor.u32 1.1754944e-38, %v1549
    %v1551 = vsel %vm1548, %v1550, %v1546
    %v1552 = vmul.f32 1.0, %v1551
    %v1553 = vtanh.pop %v1533
    %v1554 = vmul.f32 %v1552, %v1409
    %1556 = vrot.lane.b32.xlu0 %v1553, 64
    %v1557 = vpop.permute.xlu0 %1556
    %v1559 = vmul.f32 %v1552, %v1557
    %1561 = vrot.lane.b32.xlu0 %v1559, 32
    %v1562 = vpop.permute.xlu0 %1561
    %v1564 = vadd.f32 %v1554, %v1562
    %v1565 = vtanh.pop %v1564
    %1567 = vrot.lane.b32.xlu0 %v1565, 64
    %v1568 = vpop.permute.xlu0 %1567
    %v1570 = vmul.f32 %v1552, %v1568
    %1572 = vrot.lane.b32.xlu0 %v1570, 32
    %v1573 = vpop.permute.xlu0 %1572
    %1575 = vst.msk [vmem:[#allocation2 + $0x1c] sm:$0xf] %vm501, %v1573
    %1576 = vrot.lane.b32.xlu0 %v1506, 32
    %v1577 = vpop.permute.xlu0 %1576
    %vm1579 = vcmask 261124
    %1580 = vst.msk [vmem:[#allocation16 - $0x4] sm:$0xf0] %vm1579, %v1577
    %s1581 = scalar_lea.vmem [#allocation16], 4
    %1582 = vst.msk [vmem:[%s1581] sm:$0xf] %vm501, %v1573
    %1584 = vrot.lane.b32.xlu0 %v1500, 96
    %v1585 = vpop.permute.xlu0 %1584
    %1587 = vst.msk [vmem:[#allocation18 - $0x4] sm:$0xf0] %vm1579, %v1585
    %1589 = vrot.lane.b32.xlu0 %v1564, 96
    %v1590 = vpop.permute.xlu0 %1589
    %s1592 = scalar_lea.vmem [#allocation18], 4
    %1593 = vst.msk [vmem:[%s1592] sm:$0xf] %vm501, %v1590
    %v1594 = vld [vmem:[#allocation2] sm:$0xff]
    %v1595 = vld [vmem:[#allocation2 + $0x8] sm:$0xff]
    %v1596 = vld [vmem:[#allocation2 + $0x10] sm:$0xff]
    %v1597 = vld [vmem:[#allocation2 + $0x18] sm:$0xff]
    %v1598 = vld [vmem:[#allocation12] sm:$0xff]
    %v1599 = vld [vmem:[#allocation12 + $0x8] sm:$0xff]
    %v1600 = vld [vmem:[#allocation12 + $0x10] sm:$0xff]
    %v1601 = vld [vmem:[#allocation12 + $0x18] sm:$0xff]
    %v1602 = vld [vmem:[%s12] sm:$0x1]
    %v1604 = vperm.slane %v1602, 0
    %v1607 = vsel %vm338, %v1594, 0
    %v1610 = vsel %vm338, %v1595, 0
    %v1613 = vsel %vm338, %v1596, 0
    %v1616 = vsel %vm338, %v1597, 0
    %1618 = vmatpush.msra.mxu0 0.0
    %1619 = vmatpush.msra.mxu0 0.0
    %1620 = vmatpush.msra.mxu0 0.0
    %1621 = vmatpush.msra.mxu0 0.0
    %1622 = vmatpush.msra.mxu0 0.0
    %1623 = vmatpush.msra.mxu0 0.0
    %1624 = vmatpush.msra.mxu0 0.0
    %1625 = vmatpush.msra.mxu0 0.0
    %1626 = vmatpush.msra.mxu0 0.0
    %1627 = vmatpush.msra.mxu0 0.0
    %1628 = vmatpush.msra.mxu0 0.0
    %1629 = vmatpush.msra.mxu0 0.0
    %1630 = vmatpush.msra.mxu0 %v1601
    %1631 = vmatpush.msra.mxu0 %v1600
    %1632 = vmatpush.msra.mxu0 %v1599
    %1633 = vmatpush.msra.mxu0 %v1598
    %1634 = vmatmul.f32.gmra.mxu0 %v1607
    %v1635 = vpop.f32.mrf.mxu0
    %v1636 = vadd.f32 %v1604, %v1635
    %1637 = vmatmul.f32.gmra.mxu0 %v1610
    %v1638 = vpop.f32.mrf.mxu0
    %v1639 = vadd.f32 %v1604, %v1638
    %1640 = vmatmul.f32.gmra.mxu0 %v1613
    %v1641 = vpop.f32.mrf.mxu0
    %v1642 = vadd.f32 %v1604, %v1641
    %1643 = vmatmul.f32.gmra.mxu0 %v1616
    %v1644 = vpop.f32.mrf.mxu0
    %v1645 = vadd.f32 %v1604, %v1644
    %1646 = vdwg.mxu0
    %vm1647 = vcmask 523264
    %1648 = vst.msk [vmem:[#allocation15] sm:$0xff] %vm1647, %v1636
    %1649 = vst.msk [vmem:[#allocation15 + $0x8] sm:$0xff] %vm1647, %v1639
    %1650 = vst.msk [vmem:[#allocation15 + $0x10] sm:$0xff] %vm1647, %v1642
    %1651 = vst.msk [vmem:[#allocation15 + $0x18] sm:$0xff] %vm1647, %v1645
    // Predicated region
    $region90: #{tpu_custom_call.1} parent=1 // pred_check
      _
    $region91: #{tpu_custom_call.1} parent=1 // pred_check_branch
      %1653 = sbr.rel (0) target = $region93
    $region92: #{tpu_custom_call.1} parent=1 // pred_region
      %1655 = vsyncadd [#allocation5], 0
      %s1656 = sshll.u32 [#allocation15], 4
      %s1657 = int_to_ptr.vmem [resolvable:$true] %s1656
      %s1658 = sshll.u32 %s15, 4
      %s1659 = int_to_ptr.hbm [resolvable:$true] %s1658
      %1664 = dma.vmem_to_hbm [thread:$0]  %s1657, 512, %s1659, [#allocation5], 128, 128, 8
    $region93: #{tpu_custom_call.1} parent=1 // pred_fallthru
      _
    // Predicated region
    $region94: #{tpu_custom_call.1} parent=1 // pred_check
      _
    $region95: #{tpu_custom_call.1} parent=1 // pred_check_branch
      %1666 = sbr.rel (0) target = $region97
    $region96: #{tpu_custom_call.1} parent=1 // pred_region
      %1668 = vsyncadd [#allocation17], 0
      %s1669 = sshll.u32 [#allocation16], 4
      %s1670 = int_to_ptr.vmem [resolvable:$true] %s1669
      %s1671 = sshll.u32 %s16, 4
      %s1672 = int_to_ptr.hbm [resolvable:$true] %s1671
      %1677 = dma.vmem_to_hbm [thread:$0]  %s1670, 128, %s1672, [#allocation17], 64, 64, 4
    $region97: #{tpu_custom_call.1} parent=1 // pred_fallthru
      _
    // Predicated region
    $region98: #{tpu_custom_call.1} parent=1 // pred_check
      _
    $region99: #{tpu_custom_call.1} parent=1 // pred_check_branch
      %1679 = sbr.rel (0) target = $region101
    $region100: #{tpu_custom_call.1} parent=1 // pred_region
      %1681 = vsyncadd [#allocation17], 0
      %s1682 = sshll.u32 [#allocation18], 4
      %s1683 = int_to_ptr.vmem [resolvable:$true] %s1682
      %s1684 = sshll.u32 %s17, 4
      %s1685 = int_to_ptr.hbm [resolvable:$true] %s1684
      %1690 = dma.vmem_to_hbm [thread:$0]  %s1683, 128, %s1685, [#allocation17], 64, 64, 4
    $region101: #{tpu_custom_call.1} parent=1 // pred_fallthru
      _
    // Predicated region
    $region102: #{tpu_custom_call.1} parent=1 // pred_check
      _
    $region103: #{tpu_custom_call.1} parent=1 // pred_check_branch
      %1692 = sbr.rel (0) target = $region105
    $region104: #{tpu_custom_call.1} parent=1 // pred_region
      %1694 = dma.done [#allocation5], 512
    $region105: #{tpu_custom_call.1} parent=1 // pred_fallthru
      _
    // Predicated region
    $region106: #{tpu_custom_call.1} parent=1 // pred_check
      _
    $region107: #{tpu_custom_call.1} parent=1 // pred_check_branch
      %1696 = sbr.rel (0) target = $region109
    $region108: #{tpu_custom_call.1} parent=1 // pred_region
      %1698 = dma.done [#allocation17], 128
    $region109: #{tpu_custom_call.1} parent=1 // pred_fallthru
      _
    // Predicated region
    $region110: #{tpu_custom_call.1} parent=1 // pred_check
      _
    $region111: #{tpu_custom_call.1} parent=1 // pred_check_branch
      %1700 = sbr.rel (0) target = $region113
    $region112: #{tpu_custom_call.1} parent=1 // pred_region
      %1702 = dma.done [#allocation17], 128
    $region113: #{tpu_custom_call.1} parent=1 // pred_fallthru
      _
    %1703 = vsyncpa [#allocation4], 1
    %1704 = vsyncpa [#allocation7], 1
    %1705 = vsyncpa [#allocation10], 1
    %1706 = vsyncpa [#allocation13], 1
    %1707 = vsyncpa [#allocation5], 1
    %1708 = vsyncpa [#allocation17], 1

</llo_original>
